<compile_context>
chip_gen: v7x
topology: tpu7x:2x2x1
jax: 0.10.0
libtpu: 0.0.40
codegen_flags: <defaults>
</compile_context>

<pallas_src>
import jax
import jax.numpy as jnp
from jax import lax
from jax.experimental import pallas as pl
from jax.experimental.pallas import tpu as pltpu


# ----------------------------------------------------------------------------
# Fused kernel: per grid step, a chunk of `batch_block` batch elements.
#   inter  = max_j ( E2[b,:,j,:] * K[b,:,j,:] )            -> (entire, E)
#   att    = softmax_over_entire( inter @ W_int^T )        -> (entire, C)
#   bmm    = inter^T @ att                                 -> (E, C)
#   X      = raw row-major reinterpretation of bmm -> (C, E)   (torch reshape)
#   h      = relu( X @ W1^T + b1 )                          -> (C, 2L)
#   agreg  = w2 @ h^T + b2                                  -> (1, C)
#   prob   = softmax(agreg)                                 -> (1, C)
# ----------------------------------------------------------------------------
def _fused_kernel(e2_ref, k_ref, wint_ref, w1p_ref, b1_ref, w2_ref, b2_ref,
                  agreg_ref, prob_ref):
    BB, entire, RE = e2_ref.shape
    C, E = wint_ref.shape
    R = RE // E
    q = E // C          # bmm rows per aggregation row (requires E % C == 0)

    # Row-selection matrices implementing the PyTorch raw reshape
    # (E, C) row-major -> (C, E):  row j of X is the flat concatenation of bmm
    # rows j*q .. j*q+q-1.   sel[p][j, e] = 1.0 iff e == j*q + p.
    j_ids = lax.broadcasted_iota(jnp.int32, (C, E), 0)
    e_ids = lax.broadcasted_iota(jnp.int32, (C, E), 1)
    sel = [(e_ids == j_ids * q + p).astype(jnp.float32) for p in range(q)]

    w_int = wint_ref[...]            # (C, E)
    b1 = b1_ref[...]                 # (1, 2L)
    w2 = w2_ref[...]                 # (1, 2L)
    b2 = b2_ref[0]                   # scalar, SMEM

    for b in range(BB):              # static unroll over the batch chunk
        prod = e2_ref[b] * k_ref[b]                              # (entire, R*E)
        inter = prod[:, 0:E]
        for j in range(1, R):                                    # max over region axis
            inter = jnp.maximum(inter, prod[:, j * E:(j + 1) * E])

        # class-attention logits + softmax over the sequence axis (torch dim=1)
        logits = lax.dot_general(inter, w_int, (((1,), (1,)), ((), ())),
                                 preferred_element_type=jnp.float32)   # (entire, C)
        mx = jnp.max(logits, axis=0, keepdims=True)
        ex = jnp.exp(logits - mx)
        att = ex * pl.reciprocal(jnp.sum(ex, axis=0, keepdims=True), approx=True)

        # torch.bmm(Inter^T, att) -> (E, C)
        bmm = lax.dot_general(inter, att, (((0,), (0,)), ((), ())),
                              preferred_element_type=jnp.float32)

        # aggregation1 on the raw-reshaped (C, E) rows:
        #   H = sum_p (sel_p @ bmm) @ W1[:, p*C:(p+1)*C]^T
        # (no in-kernel minor-dim reshape of the bmm result needed)
        h = None
        for p in range(q):
            o_p = jnp.dot(sel[p], bmm, preferred_element_type=jnp.float32)    # (C, C)
            term = lax.dot_general(o_p, w1p_ref[p], (((1,), (1,)), ((), ())),
                                   preferred_element_type=jnp.float32)        # (C, 2L)
            h = term if h is None else h + term
        h = jnp.maximum(h + b1, 0.0)          # ReLU(. + b1); dropout = identity (eval)

        a = lax.dot_general(w2, h, (((1,), (1,)), ((), ())),
                            preferred_element_type=jnp.float32) + b2          # (1, C)
        agreg_ref[0, b:b + 1, :] = a.astype(agreg_ref.dtype)

        amx = jnp.max(a, axis=-1, keepdims=True)
        aex = jnp.exp(a - amx)
        p_row = aex * pl.reciprocal(jnp.sum(aex, axis=-1, keepdims=True), approx=True)
        prob_ref[0, b:b + 1, :] = p_row.astype(prob_ref.dtype)


def exam_additional_attention_forward(tokens, params, *, embedding_size,
                                      region_size, num_classes, max_length,
                                      batch_block=None):
    B, L = tokens.shape
    E, R, C = embedding_size, region_size, num_classes
    r = R // 2
    entire = L - 2 * r
    two_l = 2 * max_length

    if E % C != 0:
        # TODO(synk): general embedding_size needs a different decomposition of
        # the raw (B, E, C) -> (B*C, E) reinterpretation inside the kernel.
        raise NotImplementedError("embedding_size must be divisible by num_classes")
    q = E // C

    if batch_block is None:
        batch_block = B              # one fused grid step for the whole batch
                                     # (use B // 2 on v7x for 2-way TC parallelism)
    assert B % batch_block == 0
    num_blocks = B // batch_block

    emb_region = params["emb_region"]   # (V, R*E)
    emb_word = params["emb_word"]       # (V, E)
    w_int = params["w_int"]             # (C, E)
    w1 = params["w_agg1"]               # (2L, E)
    b1 = params["b_agg1"]               # (2L,)
    w2 = params["w_agg2"]               # (1, 2L)
    b2 = params["b_agg2"]               # (1,)

    # ---------------- embedding glue (gathers + PyTorch-exact raw reshapes) ----
    # No HBM-side transposes: both big tensors stay in natural row-major layout.
    trimmed = tokens[:, r:L - r]                                 # (B, entire)
    k_flat = emb_region[trimmed]                                 # (B, entire, R*E) == torch K, flattened
    # word windows: e_idx[b, j, i] = tokens[b, i + j]  (== torch E after its transposes)
    e_idx = jnp.stack([tokens[:, j:j + entire] for j in range(R)], axis=1)  # (B, R, entire)
    e1 = emb_word[e_idx]                                         # (B, R, entire, E)
    e2_flat = e1.reshape(B, entire, R * E)                       # torch's RAW E2 reshape, flattened

    # pre-split aggregation1 weight into q lane-contiguous (2L, C) chunks (host side, free)
    w1p = w1.reshape(two_l, q, C).transpose(1, 0, 2)             # (q, 2L, C)

    agreg_blk, prob_blk = pl.pallas_call(
        _fused_kernel,
        out_shape=(
            jax.ShapeDtypeStruct((num_blocks, batch_block, C), jnp.float32),
            jax.ShapeDtypeStruct((num_blocks, batch_block, C), jnp.float32),
        ),
        grid=(num_blocks,),
        in_specs=[
            pl.BlockSpec((batch_block, entire, R * E), lambda g: (g, 0, 0)),   # E2
            pl.BlockSpec((batch_block, entire, R * E), lambda g: (g, 0, 0)),   # K
            pl.BlockSpec((C, E), lambda g: (0, 0)),                            # W_int
            pl.BlockSpec((q, two_l, C), lambda g: (0, 0, 0)),                  # W1 (pre-split)
            pl.BlockSpec((1, two_l), lambda g: (0, 0)),                        # b1
            pl.BlockSpec((1, two_l), lambda g: (0, 0)),                        # w2
            pl.BlockSpec(memory_space=pltpu.MemorySpace.SMEM),                 # b2 scalar
        ],
        out_specs=(
            pl.BlockSpec((1, batch_block, C), lambda g: (g, 0, 0)),
            pl.BlockSpec((1, batch_block, C), lambda g: (g, 0, 0)),
        ),
        compiler_params=pltpu.CompilerParams(dimension_semantics=("parallel",)),
    )(e2_flat, k_flat, w_int, w1p, b1.reshape(1, two_l), w2, b2)

    agreg = agreg_blk.reshape(B, C)
    prob = prob_blk.reshape(B, C)
    # torch returns int64 indices; JAX default (x64 off) gives int32.
    class_ = jnp.argmax(prob, axis=1).astype(jnp.int32)
    return agreg, prob, class_


def init_params(key, voca_size, embedding_size, region_size, num_classes, max_length):
    E, R, C, L = embedding_size, region_size, num_classes, max_length
    ks = jax.random.split(key, 7)

    def uni(k, shape, a):
        return jax.random.uniform(k, shape, jnp.float32, -a, a)

    def xavier(k, shape):  # Linear weight (out, in): bound = sqrt(6/(in+out))
        return uni(k, shape, (6.0 / (shape[0] + shape[1])) ** 0.5)

    # NOTE: PyTorch's padding_idx=0 row is overwritten by .uniform_() in the
    # original __init__, so we deliberately do NOT zero row 0 here.
    return {
        "emb_region": uni(ks[0], (voca_size, R * E), 0.01),
        "emb_word": uni(ks[1], (voca_size, E), 0.01),
        "w_int": uni(ks[2], (C, E), 0.01),
        "w_agg1": xavier(ks[3], (2 * L, E)),
        "b_agg1": uni(ks[4], (2 * L,), 1.0 / (E ** 0.5)),       # default Linear bias init
        "w_agg2": xavier(ks[5], (1, 2 * L)),
        "b_agg2": uni(ks[6], (1,), 1.0 / ((2 * L) ** 0.5)),
    }


if __name__ == "__main__":
    voca_size = 50
    embedding_size = 32
    region_size = 3
    num_classes = 8
    max_length = 16
    batch = 2

    key = jax.random.PRNGKey(0)
    pkey, tkey = jax.random.split(key)
    params = init_params(pkey, voca_size, embedding_size, region_size,
                         num_classes, max_length)
    tokens = jax.random.randint(tkey, (batch, max_length), 0, voca_size,
                                dtype=jnp.int32)

    agreg, prob, cls = exam_additional_attention_forward(
        tokens, params,
        embedding_size=embedding_size, region_size=region_size,
        num_classes=num_classes, max_length=max_length)
    jax.block_until_ready((agreg, prob, cls))

    assert agreg.shape == (batch, num_classes)
    assert prob.shape == (batch, num_classes)
    assert cls.shape == (batch,)
    print("KERNEL_OK")
</pallas_src>

<mosaic_0001>
module attributes {stable_mosaic.version = 11 : i64} {
  func.func @_fused_kernel(%arg0: i32, %arg1: memref<2x14x96xf32, #tpu.memory_space<vmem>>, %arg2: memref<2x14x96xf32, #tpu.memory_space<vmem>>, %arg3: memref<8x32xf32, #tpu.memory_space<vmem>>, %arg4: memref<4x32x8xf32, #tpu.memory_space<vmem>>, %arg5: memref<1x32xf32, #tpu.memory_space<vmem>>, %arg6: memref<1x32xf32, #tpu.memory_space<vmem>>, %arg7: memref<1xf32, #tpu.memory_space<smem>>, %arg8: memref<1x2x8xf32, #tpu.memory_space<vmem>>, %arg9: memref<1x2x8xf32, #tpu.memory_space<vmem>>) attributes {dimension_semantics = [#tpu.dimension_semantics<parallel>], iteration_bounds = array<i64: 1>, scalar_prefetch = 0 : i64, scratch_operands = 0 : i64, tpu.core_type = #tpu.core_type<tc>, window_params = [{transform_indices = @transform_0, window_bounds = array<i64: 2, 14, 96>}, {transform_indices = @transform_1, window_bounds = array<i64: 2, 14, 96>}, {pipeline_mode = #tpu.pipeline_mode<synchronous>, transform_indices = @transform_2, window_bounds = array<i64: 8, 32>}, {pipeline_mode = #tpu.pipeline_mode<synchronous>, transform_indices = @transform_3, window_bounds = array<i64: 4, 32, 8>}, {pipeline_mode = #tpu.pipeline_mode<synchronous>, transform_indices = @transform_4, window_bounds = array<i64: 1, 32>}, {pipeline_mode = #tpu.pipeline_mode<synchronous>, transform_indices = @transform_5, window_bounds = array<i64: 1, 32>}, {transform_indices = @transform_6, window_bounds = array<i64: 1>}, {transform_indices = @transform_7, window_bounds = array<i64: 1, 2, 8>}, {transform_indices = @transform_8, window_bounds = array<i64: 1, 2, 8>}]} {
    %0 = tpu.iota {dimensions = array<i32: 0>} : vector<8x32xi32>
    %1 = tpu.iota {dimensions = array<i32: 1>} : vector<8x32xi32>
    %c4_i32 = arith.constant 4 : i32
    %2 = vector.broadcast %c4_i32 : i32 to vector<8x32xi32>
    %3 = arith.muli %0, %2 : vector<8x32xi32>
    %c0_i32 = arith.constant 0 : i32
    %4 = vector.broadcast %c0_i32 : i32 to vector<8x32xi32>
    %5 = arith.addi %3, %4 : vector<8x32xi32>
    %6 = arith.cmpi eq, %1, %5 : vector<8x32xi32>
    %7 = arith.extui %6 : vector<8x32xi1> to vector<8x32xi32>
    %8 = arith.sitofp %7 : vector<8x32xi32> to vector<8x32xf32>
    %c4_i32_0 = arith.constant 4 : i32
    %9 = vector.broadcast %c4_i32_0 : i32 to vector<8x32xi32>
    %10 = arith.muli %0, %9 : vector<8x32xi32>
    %c1_i32 = arith.constant 1 : i32
    %11 = vector.broadcast %c1_i32 : i32 to vector<8x32xi32>
    %12 = arith.addi %10, %11 : vector<8x32xi32>
    %13 = arith.cmpi eq, %1, %12 : vector<8x32xi32>
    %14 = arith.extui %13 : vector<8x32xi1> to vector<8x32xi32>
    %15 = arith.sitofp %14 : vector<8x32xi32> to vector<8x32xf32>
    %c4_i32_1 = arith.constant 4 : i32
    %16 = vector.broadcast %c4_i32_1 : i32 to vector<8x32xi32>
    %17 = arith.muli %0, %16 : vector<8x32xi32>
    %c2_i32 = arith.constant 2 : i32
    %18 = vector.broadcast %c2_i32 : i32 to vector<8x32xi32>
    %19 = arith.addi %17, %18 : vector<8x32xi32>
    %20 = arith.cmpi eq, %1, %19 : vector<8x32xi32>
    %21 = arith.extui %20 : vector<8x32xi1> to vector<8x32xi32>
    %22 = arith.sitofp %21 : vector<8x32xi32> to vector<8x32xf32>
    %c4_i32_2 = arith.constant 4 : i32
    %23 = vector.broadcast %c4_i32_2 : i32 to vector<8x32xi32>
    %24 = arith.muli %0, %23 : vector<8x32xi32>
    %c3_i32 = arith.constant 3 : i32
    %25 = vector.broadcast %c3_i32 : i32 to vector<8x32xi32>
    %26 = arith.addi %24, %25 : vector<8x32xi32>
    %27 = arith.cmpi eq, %1, %26 : vector<8x32xi32>
    %28 = arith.extui %27 : vector<8x32xi1> to vector<8x32xi32>
    %29 = arith.sitofp %28 : vector<8x32xi32> to vector<8x32xf32>
    %c0 = arith.constant 0 : index
    %c0_3 = arith.constant 0 : index
    %30 = vector.load %arg3[%c0, %c0_3] : memref<8x32xf32, #tpu.memory_space<vmem>>, vector<8x32xf32>
    %c0_4 = arith.constant 0 : index
    %c0_5 = arith.constant 0 : index
    %31 = vector.load %arg5[%c0_4, %c0_5] : memref<1x32xf32, #tpu.memory_space<vmem>>, vector<1x32xf32>
    %c0_6 = arith.constant 0 : index
    %c0_7 = arith.constant 0 : index
    %32 = vector.load %arg6[%c0_6, %c0_7] : memref<1x32xf32, #tpu.memory_space<vmem>>, vector<1x32xf32>
    %c0_8 = arith.constant 0 : index
    %33 = memref.load %arg7[%c0_8] : memref<1xf32, #tpu.memory_space<smem>>
    %c0_9 = arith.constant 0 : index
    %c0_10 = arith.constant 0 : index
    %c0_11 = arith.constant 0 : index
    %34 = vector.load %arg1[%c0_9, %c0_10, %c0_11] : memref<2x14x96xf32, #tpu.memory_space<vmem>>, vector<1x14x96xf32>
    %35 = vector.shape_cast %34 : vector<1x14x96xf32> to vector<14x96xf32>
    %c0_12 = arith.constant 0 : index
    %c0_13 = arith.constant 0 : index
    %c0_14 = arith.constant 0 : index
    %36 = vector.load %arg2[%c0_12, %c0_13, %c0_14] : memref<2x14x96xf32, #tpu.memory_space<vmem>>, vector<1x14x96xf32>
    %37 = vector.shape_cast %36 : vector<1x14x96xf32> to vector<14x96xf32>
    %38 = arith.mulf %35, %37 : vector<14x96xf32>
    %39 = vector.extract_strided_slice %38 {offsets = [0, 0], sizes = [14, 32], strides = [1, 1]} : vector<14x96xf32> to vector<14x32xf32>
    %40 = vector.extract_strided_slice %38 {offsets = [0, 32], sizes = [14, 32], strides = [1, 1]} : vector<14x96xf32> to vector<14x32xf32>
    %41 = arith.maximumf %39, %40 : vector<14x32xf32>
    %42 = vector.extract_strided_slice %38 {offsets = [0, 64], sizes = [14, 32], strides = [1, 1]} : vector<14x96xf32> to vector<14x32xf32>
    %43 = arith.maximumf %41, %42 : vector<14x32xf32>
    %cst = arith.constant dense<0.000000e+00> : vector<14x8xf32>
    %44 = tpu.matmul %43, %30, %cst {dimension_numbers = #tpu.dot_dimension_numbers<[1], [1], [0], [0], [0, 0, 1, 0], [], []>} : vector<14x32xf32>, vector<8x32xf32>, vector<14x8xf32> -> vector<14x8xf32>
    %cst_15 = arith.constant dense<0xFF800000> : vector<8xf32>
    %45 = vector.multi_reduction <maximumf>, %44, %cst_15 [0] : vector<14x8xf32> to vector<8xf32>
    %46 = vector.shape_cast %45 : vector<8xf32> to vector<1x8xf32>
    %47 = vector.broadcast %46 : vector<1x8xf32> to vector<14x8xf32>
    %48 = arith.subf %44, %47 : vector<14x8xf32>
    %49 = math.exp %48 : vector<14x8xf32>
    %cst_16 = arith.constant dense<0.000000e+00> : vector<8xf32>
    %50 = vector.multi_reduction <add>, %49, %cst_16 [0] : vector<14x8xf32> to vector<8xf32>
    %51 = vector.shape_cast %50 : vector<8xf32> to vector<1x8xf32>
    %52 = tpu.reciprocal %51 {approx = true} : vector<1x8xf32> -> vector<1x8xf32>
    %53 = vector.broadcast %52 : vector<1x8xf32> to vector<14x8xf32>
    %54 = arith.mulf %49, %53 : vector<14x8xf32>
    %cst_17 = arith.constant dense<0.000000e+00> : vector<32x8xf32>
    %55 = tpu.matmul %43, %54, %cst_17 {dimension_numbers = #tpu.dot_dimension_numbers<[0], [0], [1], [1], [0, 1, 1, 1], [], []>} : vector<14x32xf32>, vector<14x8xf32>, vector<32x8xf32> -> vector<32x8xf32>
    %cst_18 = arith.constant dense<0.000000e+00> : vector<8x8xf32>
    %56 = tpu.matmul %8, %55, %cst_18 {dimension_numbers = #tpu.dot_dimension_numbers<[1], [0], [0], [1], [0, 0, 1, 1], [], []>} : vector<8x32xf32>, vector<32x8xf32>, vector<8x8xf32> -> vector<8x8xf32>
    %c0_19 = arith.constant 0 : index
    %c0_20 = arith.constant 0 : index
    %c0_21 = arith.constant 0 : index
    %57 = vector.load %arg4[%c0_19, %c0_20, %c0_21] : memref<4x32x8xf32, #tpu.memory_space<vmem>>, vector<1x32x8xf32>
    %58 = vector.shape_cast %57 : vector<1x32x8xf32> to vector<32x8xf32>
    %cst_22 = arith.constant dense<0.000000e+00> : vector<8x32xf32>
    %59 = tpu.matmul %56, %58, %cst_22 {dimension_numbers = #tpu.dot_dimension_numbers<[1], [1], [0], [0], [0, 0, 1, 0], [], []>} : vector<8x8xf32>, vector<32x8xf32>, vector<8x32xf32> -> vector<8x32xf32>
    %cst_23 = arith.constant dense<0.000000e+00> : vector<8x8xf32>
    %60 = tpu.matmul %15, %55, %cst_23 {dimension_numbers = #tpu.dot_dimension_numbers<[1], [0], [0], [1], [0, 0, 1, 1], [], []>} : vector<8x32xf32>, vector<32x8xf32>, vector<8x8xf32> -> vector<8x8xf32>
    %c1 = arith.constant 1 : index
    %c0_24 = arith.constant 0 : index
    %c0_25 = arith.constant 0 : index
    %61 = vector.load %arg4[%c1, %c0_24, %c0_25] : memref<4x32x8xf32, #tpu.memory_space<vmem>>, vector<1x32x8xf32>
    %62 = vector.shape_cast %61 : vector<1x32x8xf32> to vector<32x8xf32>
    %cst_26 = arith.constant dense<0.000000e+00> : vector<8x32xf32>
    %63 = tpu.matmul %60, %62, %cst_26 {dimension_numbers = #tpu.dot_dimension_numbers<[1], [1], [0], [0], [0, 0, 1, 0], [], []>} : vector<8x8xf32>, vector<32x8xf32>, vector<8x32xf32> -> vector<8x32xf32>
    %64 = arith.addf %59, %63 : vector<8x32xf32>
    %cst_27 = arith.constant dense<0.000000e+00> : vector<8x8xf32>
    %65 = tpu.matmul %22, %55, %cst_27 {dimension_numbers = #tpu.dot_dimension_numbers<[1], [0], [0], [1], [0, 0, 1, 1], [], []>} : vector<8x32xf32>, vector<32x8xf32>, vector<8x8xf32> -> vector<8x8xf32>
    %c2 = arith.constant 2 : index
    %c0_28 = arith.constant 0 : index
    %c0_29 = arith.constant 0 : index
    %66 = vector.load %arg4[%c2, %c0_28, %c0_29] : memref<4x32x8xf32, #tpu.memory_space<vmem>>, vector<1x32x8xf32>
    %67 = vector.shape_cast %66 : vector<1x32x8xf32> to vector<32x8xf32>
    %cst_30 = arith.constant dense<0.000000e+00> : vector<8x32xf32>
    %68 = tpu.matmul %65, %67, %cst_30 {dimension_numbers = #tpu.dot_dimension_numbers<[1], [1], [0], [0], [0, 0, 1, 0], [], []>} : vector<8x8xf32>, vector<32x8xf32>, vector<8x32xf32> -> vector<8x32xf32>
    %69 = arith.addf %64, %68 : vector<8x32xf32>
    %cst_31 = arith.constant dense<0.000000e+00> : vector<8x8xf32>
    %70 = tpu.matmul %29, %55, %cst_31 {dimension_numbers = #tpu.dot_dimension_numbers<[1], [0], [0], [1], [0, 0, 1, 1], [], []>} : vector<8x32xf32>, vector<32x8xf32>, vector<8x8xf32> -> vector<8x8xf32>
    %c3 = arith.constant 3 : index
    %c0_32 = arith.constant 0 : index
    %c0_33 = arith.constant 0 : index
    %71 = vector.load %arg4[%c3, %c0_32, %c0_33] : memref<4x32x8xf32, #tpu.memory_space<vmem>>, vector<1x32x8xf32>
    %72 = vector.shape_cast %71 : vector<1x32x8xf32> to vector<32x8xf32>
    %cst_34 = arith.constant dense<0.000000e+00> : vector<8x32xf32>
    %73 = tpu.matmul %70, %72, %cst_34 {dimension_numbers = #tpu.dot_dimension_numbers<[1], [1], [0], [0], [0, 0, 1, 0], [], []>} : vector<8x8xf32>, vector<32x8xf32>, vector<8x32xf32> -> vector<8x32xf32>
    %74 = arith.addf %69, %73 : vector<8x32xf32>
    %75 = vector.broadcast %31 : vector<1x32xf32> to vector<8x32xf32>
    %76 = arith.addf %74, %75 : vector<8x32xf32>
    %cst_35 = arith.constant 0.000000e+00 : f32
    %77 = vector.broadcast %cst_35 : f32 to vector<8x32xf32>
    %78 = arith.maximumf %76, %77 : vector<8x32xf32>
    %cst_36 = arith.constant dense<0.000000e+00> : vector<1x8xf32>
    %79 = tpu.matmul %32, %78, %cst_36 {dimension_numbers = #tpu.dot_dimension_numbers<[1], [1], [0], [0], [0, 0, 1, 0], [], []>} : vector<1x32xf32>, vector<8x32xf32>, vector<1x8xf32> -> vector<1x8xf32>
    %80 = vector.broadcast %33 : f32 to vector<1x8xf32>
    %81 = arith.addf %79, %80 : vector<1x8xf32>
    %c0_37 = arith.constant 0 : index
    %c0_38 = arith.constant 0 : index
    %c0_39 = arith.constant 0 : index
    %82 = vector.load %arg8[%c0_37, %c0_38, %c0_39] : memref<1x2x8xf32, #tpu.memory_space<vmem>>, vector<1x1x8xf32>
    %83 = vector.shape_cast %82 : vector<1x1x8xf32> to vector<1x8xf32>
    %84 = vector.shape_cast %81 : vector<1x8xf32> to vector<1x1x8xf32>
    tpu.vector_store %arg8[%c0_37, %c0_38, %c0_39], %84 {strides = array<i32>} : memref<1x2x8xf32, #tpu.memory_space<vmem>>, vector<1x1x8xf32>,
    %cst_40 = arith.constant dense<0xFF800000> : vector<1xf32>
    %85 = vector.multi_reduction <maximumf>, %81, %cst_40 [1] : vector<1x8xf32> to vector<1xf32>
    %86 = vector.shape_cast %85 : vector<1xf32> to vector<1x1xf32>
    %87 = vector.broadcast %86 : vector<1x1xf32> to vector<1x8xf32>
    %88 = arith.subf %81, %87 : vector<1x8xf32>
    %89 = math.exp %88 : vector<1x8xf32>
    %cst_41 = arith.constant dense<0.000000e+00> : vector<1xf32>
    %90 = vector.multi_reduction <add>, %89, %cst_41 [1] : vector<1x8xf32> to vector<1xf32>
    %91 = vector.shape_cast %90 : vector<1xf32> to vector<1x1xf32>
    %92 = tpu.reciprocal %91 {approx = true} : vector<1x1xf32> -> vector<1x1xf32>
    %93 = vector.broadcast %92 : vector<1x1xf32> to vector<1x8xf32>
    %94 = arith.mulf %89, %93 : vector<1x8xf32>
    %c0_42 = arith.constant 0 : index
    %c0_43 = arith.constant 0 : index
    %c0_44 = arith.constant 0 : index
    %95 = vector.load %arg9[%c0_42, %c0_43, %c0_44] : memref<1x2x8xf32, #tpu.memory_space<vmem>>, vector<1x1x8xf32>
    %96 = vector.shape_cast %95 : vector<1x1x8xf32> to vector<1x8xf32>
    %97 = vector.shape_cast %94 : vector<1x8xf32> to vector<1x1x8xf32>
    tpu.vector_store %arg9[%c0_42, %c0_43, %c0_44], %97 {strides = array<i32>} : memref<1x2x8xf32, #tpu.memory_space<vmem>>, vector<1x1x8xf32>,
    %c1_45 = arith.constant 1 : index
    %c0_46 = arith.constant 0 : index
    %c0_47 = arith.constant 0 : index
    %98 = vector.load %arg1[%c1_45, %c0_46, %c0_47] : memref<2x14x96xf32, #tpu.memory_space<vmem>>, vector<1x14x96xf32>
    %99 = vector.shape_cast %98 : vector<1x14x96xf32> to vector<14x96xf32>
    %c1_48 = arith.constant 1 : index
    %c0_49 = arith.constant 0 : index
    %c0_50 = arith.constant 0 : index
    %100 = vector.load %arg2[%c1_48, %c0_49, %c0_50] : memref<2x14x96xf32, #tpu.memory_space<vmem>>, vector<1x14x96xf32>
    %101 = vector.shape_cast %100 : vector<1x14x96xf32> to vector<14x96xf32>
    %102 = arith.mulf %99, %101 : vector<14x96xf32>
    %103 = vector.extract_strided_slice %102 {offsets = [0, 0], sizes = [14, 32], strides = [1, 1]} : vector<14x96xf32> to vector<14x32xf32>
    %104 = vector.extract_strided_slice %102 {offsets = [0, 32], sizes = [14, 32], strides = [1, 1]} : vector<14x96xf32> to vector<14x32xf32>
    %105 = arith.maximumf %103, %104 : vector<14x32xf32>
    %106 = vector.extract_strided_slice %102 {offsets = [0, 64], sizes = [14, 32], strides = [1, 1]} : vector<14x96xf32> to vector<14x32xf32>
    %107 = arith.maximumf %105, %106 : vector<14x32xf32>
    %cst_51 = arith.constant dense<0.000000e+00> : vector<14x8xf32>
    %108 = tpu.matmul %107, %30, %cst_51 {dimension_numbers = #tpu.dot_dimension_numbers<[1], [1], [0], [0], [0, 0, 1, 0], [], []>} : vector<14x32xf32>, vector<8x32xf32>, vector<14x8xf32> -> vector<14x8xf32>
    %cst_52 = arith.constant dense<0xFF800000> : vector<8xf32>
    %109 = vector.multi_reduction <maximumf>, %108, %cst_52 [0] : vector<14x8xf32> to vector<8xf32>
    %110 = vector.shape_cast %109 : vector<8xf32> to vector<1x8xf32>
    %111 = vector.broadcast %110 : vector<1x8xf32> to vector<14x8xf32>
    %112 = arith.subf %108, %111 : vector<14x8xf32>
    %113 = math.exp %112 : vector<14x8xf32>
    %cst_53 = arith.constant dense<0.000000e+00> : vector<8xf32>
    %114 = vector.multi_reduction <add>, %113, %cst_53 [0] : vector<14x8xf32> to vector<8xf32>
    %115 = vector.shape_cast %114 : vector<8xf32> to vector<1x8xf32>
    %116 = tpu.reciprocal %115 {approx = true} : vector<1x8xf32> -> vector<1x8xf32>
    %117 = vector.broadcast %116 : vector<1x8xf32> to vector<14x8xf32>
    %118 = arith.mulf %113, %117 : vector<14x8xf32>
    %cst_54 = arith.constant dense<0.000000e+00> : vector<32x8xf32>
    %119 = tpu.matmul %107, %118, %cst_54 {dimension_numbers = #tpu.dot_dimension_numbers<[0], [0], [1], [1], [0, 1, 1, 1], [], []>} : vector<14x32xf32>, vector<14x8xf32>, vector<32x8xf32> -> vector<32x8xf32>
    %cst_55 = arith.constant dense<0.000000e+00> : vector<8x8xf32>
    %120 = tpu.matmul %8, %119, %cst_55 {dimension_numbers = #tpu.dot_dimension_numbers<[1], [0], [0], [1], [0, 0, 1, 1], [], []>} : vector<8x32xf32>, vector<32x8xf32>, vector<8x8xf32> -> vector<8x8xf32>
    %c0_56 = arith.constant 0 : index
    %c0_57 = arith.constant 0 : index
    %c0_58 = arith.constant 0 : index
    %121 = vector.load %arg4[%c0_56, %c0_57, %c0_58] : memref<4x32x8xf32, #tpu.memory_space<vmem>>, vector<1x32x8xf32>
    %122 = vector.shape_cast %121 : vector<1x32x8xf32> to vector<32x8xf32>
    %cst_59 = arith.constant dense<0.000000e+00> : vector<8x32xf32>
    %123 = tpu.matmul %120, %122, %cst_59 {dimension_numbers = #tpu.dot_dimension_numbers<[1], [1], [0], [0], [0, 0, 1, 0], [], []>} : vector<8x8xf32>, vector<32x8xf32>, vector<8x32xf32> -> vector<8x32xf32>
    %cst_60 = arith.constant dense<0.000000e+00> : vector<8x8xf32>
    %124 = tpu.matmul %15, %119, %cst_60 {dimension_numbers = #tpu.dot_dimension_numbers<[1], [0], [0], [1], [0, 0, 1, 1], [], []>} : vector<8x32xf32>, vector<32x8xf32>, vector<8x8xf32> -> vector<8x8xf32>
    %c1_61 = arith.constant 1 : index
    %c0_62 = arith.constant 0 : index
    %c0_63 = arith.constant 0 : index
    %125 = vector.load %arg4[%c1_61, %c0_62, %c0_63] : memref<4x32x8xf32, #tpu.memory_space<vmem>>, vector<1x32x8xf32>
    %126 = vector.shape_cast %125 : vector<1x32x8xf32> to vector<32x8xf32>
    %cst_64 = arith.constant dense<0.000000e+00> : vector<8x32xf32>
    %127 = tpu.matmul %124, %126, %cst_64 {dimension_numbers = #tpu.dot_dimension_numbers<[1], [1], [0], [0], [0, 0, 1, 0], [], []>} : vector<8x8xf32>, vector<32x8xf32>, vector<8x32xf32> -> vector<8x32xf32>
    %128 = arith.addf %123, %127 : vector<8x32xf32>
    %cst_65 = arith.constant dense<0.000000e+00> : vector<8x8xf32>
    %129 = tpu.matmul %22, %119, %cst_65 {dimension_numbers = #tpu.dot_dimension_numbers<[1], [0], [0], [1], [0, 0, 1, 1], [], []>} : vector<8x32xf32>, vector<32x8xf32>, vector<8x8xf32> -> vector<8x8xf32>
    %c2_66 = arith.constant 2 : index
    %c0_67 = arith.constant 0 : index
    %c0_68 = arith.constant 0 : index
    %130 = vector.load %arg4[%c2_66, %c0_67, %c0_68] : memref<4x32x8xf32, #tpu.memory_space<vmem>>, vector<1x32x8xf32>
    %131 = vector.shape_cast %130 : vector<1x32x8xf32> to vector<32x8xf32>
    %cst_69 = arith.constant dense<0.000000e+00> : vector<8x32xf32>
    %132 = tpu.matmul %129, %131, %cst_69 {dimension_numbers = #tpu.dot_dimension_numbers<[1], [1], [0], [0], [0, 0, 1, 0], [], []>} : vector<8x8xf32>, vector<32x8xf32>, vector<8x32xf32> -> vector<8x32xf32>
    %133 = arith.addf %128, %132 : vector<8x32xf32>
    %cst_70 = arith.constant dense<0.000000e+00> : vector<8x8xf32>
    %134 = tpu.matmul %29, %119, %cst_70 {dimension_numbers = #tpu.dot_dimension_numbers<[1], [0], [0], [1], [0, 0, 1, 1], [], []>} : vector<8x32xf32>, vector<32x8xf32>, vector<8x8xf32> -> vector<8x8xf32>
    %c3_71 = arith.constant 3 : index
    %c0_72 = arith.constant 0 : index
    %c0_73 = arith.constant 0 : index
    %135 = vector.load %arg4[%c3_71, %c0_72, %c0_73] : memref<4x32x8xf32, #tpu.memory_space<vmem>>, vector<1x32x8xf32>
    %136 = vector.shape_cast %135 : vector<1x32x8xf32> to vector<32x8xf32>
    %cst_74 = arith.constant dense<0.000000e+00> : vector<8x32xf32>
    %137 = tpu.matmul %134, %136, %cst_74 {dimension_numbers = #tpu.dot_dimension_numbers<[1], [1], [0], [0], [0, 0, 1, 0], [], []>} : vector<8x8xf32>, vector<32x8xf32>, vector<8x32xf32> -> vector<8x32xf32>
    %138 = arith.addf %133, %137 : vector<8x32xf32>
    %139 = vector.broadcast %31 : vector<1x32xf32> to vector<8x32xf32>
    %140 = arith.addf %138, %139 : vector<8x32xf32>
    %cst_75 = arith.constant 0.000000e+00 : f32
    %141 = vector.broadcast %cst_75 : f32 to vector<8x32xf32>
    %142 = arith.maximumf %140, %141 : vector<8x32xf32>
    %cst_76 = arith.constant dense<0.000000e+00> : vector<1x8xf32>
    %143 = tpu.matmul %32, %142, %cst_76 {dimension_numbers = #tpu.dot_dimension_numbers<[1], [1], [0], [0], [0, 0, 1, 0], [], []>} : vector<1x32xf32>, vector<8x32xf32>, vector<1x8xf32> -> vector<1x8xf32>
    %144 = vector.broadcast %33 : f32 to vector<1x8xf32>
    %145 = arith.addf %143, %144 : vector<1x8xf32>
    %c0_77 = arith.constant 0 : index
    %c1_78 = arith.constant 1 : index
    %c0_79 = arith.constant 0 : index
    %146 = vector.load %arg8[%c0_77, %c1_78, %c0_79] : memref<1x2x8xf32, #tpu.memory_space<vmem>>, vector<1x1x8xf32>
    %147 = vector.shape_cast %146 : vector<1x1x8xf32> to vector<1x8xf32>
    %148 = vector.shape_cast %145 : vector<1x8xf32> to vector<1x1x8xf32>
    tpu.vector_store %arg8[%c0_77, %c1_78, %c0_79], %148 {strides = array<i32>} : memref<1x2x8xf32, #tpu.memory_space<vmem>>, vector<1x1x8xf32>,
    %cst_80 = arith.constant dense<0xFF800000> : vector<1xf32>
    %149 = vector.multi_reduction <maximumf>, %145, %cst_80 [1] : vector<1x8xf32> to vector<1xf32>
    %150 = vector.shape_cast %149 : vector<1xf32> to vector<1x1xf32>
    %151 = vector.broadcast %150 : vector<1x1xf32> to vector<1x8xf32>
    %152 = arith.subf %145, %151 : vector<1x8xf32>
    %153 = math.exp %152 : vector<1x8xf32>
    %cst_81 = arith.constant dense<0.000000e+00> : vector<1xf32>
    %154 = vector.multi_reduction <add>, %153, %cst_81 [1] : vector<1x8xf32> to vector<1xf32>
    %155 = vector.shape_cast %154 : vector<1xf32> to vector<1x1xf32>
    %156 = tpu.reciprocal %155 {approx = true} : vector<1x1xf32> -> vector<1x1xf32>
    %157 = vector.broadcast %156 : vector<1x1xf32> to vector<1x8xf32>
    %158 = arith.mulf %153, %157 : vector<1x8xf32>
    %c0_82 = arith.constant 0 : index
    %c1_83 = arith.constant 1 : index
    %c0_84 = arith.constant 0 : index
    %159 = vector.load %arg9[%c0_82, %c1_83, %c0_84] : memref<1x2x8xf32, #tpu.memory_space<vmem>>, vector<1x1x8xf32>
    %160 = vector.shape_cast %159 : vector<1x1x8xf32> to vector<1x8xf32>
    %161 = vector.shape_cast %158 : vector<1x8xf32> to vector<1x1x8xf32>
    tpu.vector_store %arg9[%c0_82, %c1_83, %c0_84], %161 {strides = array<i32>} : memref<1x2x8xf32, #tpu.memory_space<vmem>>, vector<1x1x8xf32>,
    return
  }
  func.func @transform_0(%arg0: i32) -> (i32, i32, i32) {
    %c0_i32 = arith.constant 0 : i32
    %c0_i32_0 = arith.constant 0 : i32
    %c0_i32_1 = arith.constant 0 : i32
    return %arg0, %c0_i32, %c0_i32_0 : i32, i32, i32
  }
  func.func @transform_1(%arg0: i32) -> (i32, i32, i32) {
    %c0_i32 = arith.constant 0 : i32
    %c0_i32_0 = arith.constant 0 : i32
    %c0_i32_1 = arith.constant 0 : i32
    return %arg0, %c0_i32, %c0_i32_0 : i32, i32, i32
  }
  func.func @transform_2(%arg0: i32) -> (i32, i32) {
    %c0_i32 = arith.constant 0 : i32
    %c0_i32_0 = arith.constant 0 : i32
    %c0_i32_1 = arith.constant 0 : i32
    return %c0_i32, %c0_i32_0 : i32, i32
  }
  func.func @transform_3(%arg0: i32) -> (i32, i32, i32) {
    %c0_i32 = arith.constant 0 : i32
    %c0_i32_0 = arith.constant 0 : i32
    %c0_i32_1 = arith.constant 0 : i32
    %c0_i32_2 = arith.constant 0 : i32
    return %c0_i32, %c0_i32_0, %c0_i32_1 : i32, i32, i32
  }
  func.func @transform_4(%arg0: i32) -> (i32, i32) {
    %c0_i32 = arith.constant 0 : i32
    %c0_i32_0 = arith.constant 0 : i32
    %c0_i32_1 = arith.constant 0 : i32
    return %c0_i32, %c0_i32_0 : i32, i32
  }
  func.func @transform_5(%arg0: i32) -> (i32, i32) {
    %c0_i32 = arith.constant 0 : i32
    %c0_i32_0 = arith.constant 0 : i32
    %c0_i32_1 = arith.constant 0 : i32
    return %c0_i32, %c0_i32_0 : i32, i32
  }
  func.func @transform_6(%arg0: i32) -> i32 {
    %c0_i32 = arith.constant 0 : i32
    %c0_i32_0 = arith.constant 0 : i32
    return %c0_i32 : i32
  }
  func.func @transform_7(%arg0: i32) -> (i32, i32, i32) {
    %c0_i32 = arith.constant 0 : i32
    %c0_i32_0 = arith.constant 0 : i32
    %c0_i32_1 = arith.constant 0 : i32
    return %arg0, %c0_i32, %c0_i32_0 : i32, i32, i32
  }
  func.func @transform_8(%arg0: i32) -> (i32, i32, i32) {
    %c0_i32 = arith.constant 0 : i32
    %c0_i32_0 = arith.constant 0 : i32
    %c0_i32_1 = arith.constant 0 : i32
    return %arg0, %c0_i32, %c0_i32_0 : i32, i32, i32
  }
}

</mosaic_0001>

<llo_original>
// kernel: tpu_custom_call.1
$region0: #{tpu_custom_call.1}
  #allocation0 [shape = 'u32[]', space=smem, size = 0x4, offset = 0x4, fixed_abs, tag = 'smem constant byte address 0x4 - core index']
  #allocation1 [shape = 'u32[144,128]{1,0:T(1,128)}', space=vmem, size = 0x12000, scoped, tag = 'internal scratch']
  #allocation2 [shape = 'f32[1]{0:T(128)S(6)}', space=smem, size = 0x200, scoped, tag = 'scoped memory for tpu_custom_call.1']
  %s0 = inlined_call_operand.vmem [shape: f32[2,14,96], index: 0, kind: input, shape index: {}]
  %s1 = inlined_call_operand.vmem [shape: f32[2,14,96], index: 1, kind: input, shape index: {}]
  %s2 = inlined_call_operand.vmem [shape: f32[8,32], index: 2, kind: input, shape index: {}]
  %s3 = inlined_call_operand.vmem [shape: f32[4,32,8], index: 3, kind: input, shape index: {}]
  %s4 = inlined_call_operand.vmem [shape: f32[1,32], index: 4, kind: input, shape index: {}]
  %s5 = inlined_call_operand.vmem [shape: f32[1,32], index: 5, kind: input, shape index: {}]
  %s6 = inlined_call_operand.<no memory space> [shape: f32[1], index: 6, kind: input, shape index: {}]
  %s7 = inlined_call_operand.hbm [shape: f32[1,2,8], index: 7, kind: output, shape index: {0}]
  %s8 = inlined_call_operand.hbm [shape: f32[1,2,8], index: 8, kind: output, shape index: {1}]
  %9 = xla_tuple %s7, %s8
  %s10 = sld [smem:[#allocation0]]
  $region46: #{tpu_custom_call.1} parent=0
    _
  %s12 = ssub.s32 1, %s10
  %s13 = scalar_select 0, %s12, %s10
  %14 = sst [smem:[#allocation2]] %s6
  $region1: #{tpu_custom_call.1} parent=0
    #allocation3 [shape = 'u8[1024]{0}', space=vmem, size = 0x400, scoped, tag = 'output window, operand 0, single buffered']
    #allocation4 [shape = 's32[1]{0}', space=sflag, size = 0x4, scoped, tag = 'scoped memory for tpu_custom_call.1']
    #allocation5 [shape = 'u8[1024]{0}', space=vmem, size = 0x400, scoped, tag = 'output window, operand 1, single buffered']
    #allocation6 [shape = 's32[1]{0}', space=sflag, size = 0x4, scoped, tag = 'scoped memory for tpu_custom_call.1']
    %15 = vsyncpa [#allocation4], 0
    %16 = vsyncpa [#allocation6], 0
    // Predicated region
    $region2: #{tpu_custom_call.1} parent=1 // pred_check
      _
    $region3: #{tpu_custom_call.1} parent=1 // pred_check_branch
      %18 = sbr.rel (0) target = $region5
    $region4: #{tpu_custom_call.1} parent=1 // pred_region
      _
    $region5: #{tpu_custom_call.1} parent=1 // pred_fallthru
      _
    // Predicated region
    $region6: #{tpu_custom_call.1} parent=1 // pred_check
      _
    $region7: #{tpu_custom_call.1} parent=1 // pred_check_branch
      %20 = sbr.rel (0) target = $region9
    $region8: #{tpu_custom_call.1} parent=1 // pred_region
      _
    $region9: #{tpu_custom_call.1} parent=1 // pred_fallthru
      _
    // Predicated region
    $region10: #{tpu_custom_call.1} parent=1 // pred_check
      _
    $region11: #{tpu_custom_call.1} parent=1 // pred_check_branch
      %22 = sbr.rel (0) target = $region13
    $region12: #{tpu_custom_call.1} parent=1 // pred_region
      _
    $region13: #{tpu_custom_call.1} parent=1 // pred_fallthru
      _
    // Predicated region
    $region14: #{tpu_custom_call.1} parent=1 // pred_check
      _
    $region15: #{tpu_custom_call.1} parent=1 // pred_check_branch
      %24 = sbr.rel (0) target = $region17
    $region16: #{tpu_custom_call.1} parent=1 // pred_region
      _
    $region17: #{tpu_custom_call.1} parent=1 // pred_fallthru
      _
    // Predicated region
    $region18: #{tpu_custom_call.1} parent=1 // pred_check
      _
    $region19: #{tpu_custom_call.1} parent=1 // pred_check_branch
      %26 = sbr.rel (0) target = $region21
    $region20: #{tpu_custom_call.1} parent=1 // pred_region
      _
    $region21: #{tpu_custom_call.1} parent=1 // pred_fallthru
      _
    // Predicated region
    $region22: #{tpu_custom_call.1} parent=1 // pred_check
      _
    $region23: #{tpu_custom_call.1} parent=1 // pred_check_branch
      %28 = sbr.rel (0) target = $region25
    $region24: #{tpu_custom_call.1} parent=1 // pred_region
      _
    $region25: #{tpu_custom_call.1} parent=1 // pred_fallthru
      _
    // Predicated region
    $region26: #{tpu_custom_call.1} parent=1 // pred_check
      _
    $region27: #{tpu_custom_call.1} parent=1 // pred_check_branch
      %30 = sbr.rel (0) target = $region29
    $region28: #{tpu_custom_call.1} parent=1 // pred_region
      _
    $region29: #{tpu_custom_call.1} parent=1 // pred_fallthru
      _
    %v31 = vlaneseq
    %v32 = vshrl.u32 %v31, 7
    %v33 = vlaneseq
    %v34 = vand.u32 %v33, 127
    %v35 = vmul.u32 %v32, 4
    %vm36 = vcmp.eq.s32.totalorder %v34, %v35
    %v37 = vsel %vm36, 1, 0
    %v38 = vcvt.s32.f32 %v37
    %v39 = vadd.s32 %v35, 1
    %vm40 = vcmp.eq.s32.totalorder %v34, %v39
    %v41 = vsel %vm40, 1, 0
    %v42 = vcvt.s32.f32 %v41
    %v43 = vadd.s32 %v35, 2
    %vm44 = vcmp.eq.s32.totalorder %v34, %v43
    %v45 = vsel %vm44, 1, 0
    %v46 = vcvt.s32.f32 %v45
    %v47 = vadd.s32 %v35, 3
    %vm48 = vcmp.eq.s32.totalorder %v34, %v47
    %v49 = vsel %vm48, 1, 0
    %v50 = vcvt.s32.f32 %v49
    %v51 = vld [vmem:[%s2] sm:$0xff]
    %v52 = vld [vmem:[%s4] sm:$0x1]
    %v53 = vld [vmem:[%s5] sm:$0x1]
    %s54 = sld [smem:[#allocation2]]
    %v55 = vld [vmem:[%s0] sm:$0xff]
    %v56 = vld [vmem:[%s0 + $0x8] sm:$0x3f]
    %v57 = vld [vmem:[%s1] sm:$0xff]
    %v58 = vld [vmem:[%s1 + $0x8] sm:$0x3f]
    %v59 = vmul.f32 %v55, %v57
    %v60 = vmul.f32 %v56, %v58
    %63 = vrot.lane.b32.xlu0 %v59, 96
    %v64 = vpop.permute.xlu0 %63
    %65 = vrot.lane.b32.xlu0 %v60, 96
    %v66 = vpop.permute.xlu0 %65
    %v69 = vmax.f32 %v59, %v64
    %v70 = vmax.f32 %v60, %v66
    %71 = vrot.lane.b32.xlu0 %v59, 64
    %v72 = vpop.permute.xlu0 %71
    %73 = vrot.lane.b32.xlu0 %v60, 64
    %v74 = vpop.permute.xlu0 %73
    %v77 = vmax.f32 %v69, %v72
    %v78 = vmax.f32 %v70, %v74
    %vm79 = vcmask 261120
    %v81 = vsel %vm79, %v77, 0
    %v84 = vsel %vm79, %v78, 0
    %v87 = vsel %vm79, %v51, 0
    %89 = vmatprep.subr.mxu0 0.0
    %90 = vmatpush1.xpose.msra.mxu0 %v87
    %91 = vmatprep.subr.mxu0 0.0
    %92 = vmatpush1.xpose.msra.mxu0 0.0
    %93 = vmatprep.subr.mxu0 0.0
    %94 = vmatpush1.xpose.msra.mxu0 0.0
    %95 = vmatprep.subr.mxu0 0.0
    %96 = vmatpush1.xpose.msra.mxu0 0.0
    %97 = vmatprep.subr.mxu0 0.0
    %98 = vmatpush1.xpose.msra.mxu0 0.0
    %99 = vmatprep.subr.mxu0 0.0
    %100 = vmatpush1.xpose.msra.mxu0 0.0
    %101 = vmatprep.subr.mxu0 0.0
    %102 = vmatpush1.xpose.msra.mxu0 0.0
    %103 = vmatprep.subr.mxu0 0.0
    %104 = vmatpush1.xpose.msra.mxu0 0.0
    %105 = vmatprep.subr.mxu0 0.0
    %106 = vmatpush1.xpose.msra.mxu0 0.0
    %107 = vmatprep.subr.mxu0 0.0
    %108 = vmatpush1.xpose.msra.mxu0 0.0
    %109 = vmatprep.subr.mxu0 0.0
    %110 = vmatpush1.xpose.msra.mxu0 0.0
    %111 = vmatprep.subr.mxu0 0.0
    %112 = vmatpush1.xpose.msra.mxu0 0.0
    %113 = vmatprep.subr.mxu0 0.0
    %114 = vmatpush1.xpose.msra.mxu0 0.0
    %115 = vmatprep.subr.mxu0 0.0
    %116 = vmatpush1.xpose.msra.mxu0 0.0
    %117 = vmatprep.subr.mxu0 0.0
    %118 = vmatpush1.xpose.msra.mxu0 0.0
    %119 = vmatprep.subr.mxu0 0.0
    %120 = vmatpush1.xpose.msra.mxu0 0.0
    %121 = vmatprep.subr.mxu0 0.0
    %122 = vmatpush1.xpose.msra.mxu0 0.0
    %123 = vmatprep.subr.mxu0 0.0
    %124 = vmatpush1.xpose.msra.mxu0 0.0
    %125 = vmatprep.subr.mxu0 0.0
    %126 = vmatpush1.xpose.msra.mxu0 0.0
    %127 = vmatprep.subr.mxu0 0.0
    %128 = vmatpush1.xpose.msra.mxu0 0.0
    %129 = vmatprep.subr.mxu0 0.0
    %130 = vmatpush1.xpose.msra.mxu0 0.0
    %131 = vmatprep.subr.mxu0 0.0
    %132 = vmatpush1.xpose.msra.mxu0 0.0
    %133 = vmatprep.subr.mxu0 0.0
    %134 = vmatpush1.xpose.msra.mxu0 0.0
    %135 = vmatprep.subr.mxu0 0.0
    %136 = vmatpush1.xpose.msra.mxu0 0.0
    %137 = vmatprep.subr.mxu0 0.0
    %138 = vmatpush1.xpose.msra.mxu0 0.0
    %139 = vmatprep.subr.mxu0 0.0
    %140 = vmatpush1.xpose.msra.mxu0 0.0
    %141 = vmatprep.subr.mxu0 0.0
    %142 = vmatpush1.xpose.msra.mxu0 0.0
    %143 = vmatprep.subr.mxu0 0.0
    %144 = vmatpush1.xpose.msra.mxu0 0.0
    %145 = vmatprep.subr.mxu0 0.0
    %146 = vmatpush1.xpose.msra.mxu0 0.0
    %147 = vmatprep.subr.mxu0 0.0
    %148 = vmatpush1.xpose.msra.mxu0 0.0
    %149 = vmatprep.subr.mxu0 0.0
    %150 = vmatpush1.xpose.msra.mxu0 0.0
    %151 = vmatprep.subr.mxu0 0.0
    %152 = vmatpush1.xpose.msra.mxu0 0.0
    %153 = vmatprep.mubr.f32.mxu0 0.0
    %154 = vmatmul.mubr.f32.gmra.mrb[0].mxu0 %v81
    %v155 = vpop.f32.mrb[0].mxu0
    %v156 = vadd.f32 0.0, %v155
    %v157 = vpop.f32.mrb[0].mxu0
    %158 = vmatprep.mubr.f32.mxu0 0.0
    %159 = vmatmul.mubr.f32.gmra.mrb[0].mxu0 %v84
    %v160 = vpop.f32.mrb[0].mxu0
    %v161 = vadd.f32 0.0, %v160
    %v162 = vpop.f32.mrb[0].mxu0
    %163 = vdwg.mxu0
    %vm164 = vcmask 64512
    %v165 = vsel %vm164, %v156, -inf
    %vm166 = vcmask 62464
    %v167 = vsel %vm166, %v161, -inf
    %v168 = vmax.f32 %v165, %v167
    %v169 = vrot.slane %v168, 4
    %v170 = vmax.f32 %v168, %v169
    %v171 = vrot.slane %v170, 2
    %v172 = vmax.f32 %v170, %v171
    %v173 = vrot.slane %v172, 1
    %v174 = vmax.f32 %v172, %v173
    %v175 = vsub.f32 %v156, %v174
    %v176 = vsub.f32 %v161, %v174
    %v177 = vmul.f32 %v175, 1.442695
    %v178 = vpow.pop %v177
    %v179 = vmul.f32 %v176, 1.442695
    %v180 = vpow.pop %v179
    %v181 = vsel %vm164, %v178, 0.0
    %v182 = vsel %vm166, %v180, 0.0
    %v183 = vadd.f32 %v181, %v182
    %v184 = vrot.slane %v183, 4
    %v185 = vadd.f32 %v183, %v184
    %v186 = vrot.slane %v185, 2
    %v187 = vadd.f32 %v185, %v186
    %v188 = vrot.slane %v187, 1
    %v189 = vadd.f32 %v187, %v188
    %v190 = vrcp.pop %v189
    %v191 = vmul.f32 %v178, %v190
    %v192 = vmul.f32 %v180, %v190
    %193 = vxpose.xlu0.b32.start [1/16] %v77, 128
    %194 = vxpose.xlu0.b32.cont [2/16] %v78, 128
    %195 = vxpose.xlu0.b32.cont [3/16] 0.0, 128
    %196 = vxpose.xlu0.b32.cont [4/16] 0.0, 128
    %197 = vxpose.xlu0.b32.cont [5/16] 0.0, 128
    %198 = vxpose.xlu0.b32.cont [6/16] 0.0, 128
    %199 = vxpose.xlu0.b32.cont [7/16] 0.0, 128
    %200 = vxpose.xlu0.b32.cont [8/16] 0.0, 128
    %201 = vxpose.xlu0.b32.cont [9/16] 0.0, 128
    %202 = vxpose.xlu0.b32.cont [10/16] 0.0, 128
    %203 = vxpose.xlu0.b32.cont [11/16] 0.0, 128
    %204 = vxpose.xlu0.b32.cont [12/16] 0.0, 128
    %205 = vxpose.xlu0.b32.cont [13/16] 0.0, 128
    %206 = vxpose.xlu0.b32.cont [14/16] 0.0, 128
    %207 = vxpose.xlu0.b32.cont [15/16] 0.0, 128
    %208 = vxpose.xlu0.b32.end [16/16] 0.0, 128
    %v209 = vpop.trf.xlu0
    %v210 = vpop.trf.xlu0
    %v211 = vpop.trf.xlu0
    %v212 = vpop.trf.xlu0
    %v213 = vpop.trf.xlu0
    %v214 = vpop.trf.xlu0
    %v215 = vpop.trf.xlu0
    %v216 = vpop.trf.xlu0
    %v217 = vpop.trf.xlu0
    %v218 = vpop.trf.xlu0
    %v219 = vpop.trf.xlu0
    %v220 = vpop.trf.xlu0
    %v221 = vpop.trf.xlu0
    %v222 = vpop.trf.xlu0
    %v223 = vpop.trf.xlu0
    %v224 = vpop.trf.xlu0
    %vm225 = vcmask 113664
    %v227 = vsel %vm225, %v209, 0
    %v230 = vsel %vm225, %v210, 0
    %v233 = vsel %vm225, %v211, 0
    %v236 = vsel %vm225, %v212, 0
    %vm238 = vcmask 1045504
    %v240 = vsel %vm238, %v192, 0
    %242 = vmatprep.subr.mxu0 0.0
    %243 = vmatpush1.msra.mxu0 %v191
    %244 = vmatprep.subr.mxu0 0.0
    %245 = vmatpush1.msra.mxu0 %v240
    %246 = vmatprep.subr.mxu0 0.0
    %247 = vmatpush1.msra.mxu0 0.0
    %248 = vmatprep.subr.mxu0 0.0
    %249 = vmatpush1.msra.mxu0 0.0
    %250 = vmatprep.subr.mxu0 0.0
    %251 = vmatpush1.msra.mxu0 0.0
    %252 = vmatprep.subr.mxu0 0.0
    %253 = vmatpush1.msra.mxu0 0.0
    %254 = vmatprep.subr.mxu0 0.0
    %255 = vmatpush1.msra.mxu0 0.0
    %256 = vmatprep.subr.mxu0 0.0
    %257 = vmatpush1.msra.mxu0 0.0
    %258 = vmatprep.subr.mxu0 0.0
    %259 = vmatpush1.msra.mxu0 0.0
    %260 = vmatprep.subr.mxu0 0.0
    %261 = vmatpush1.msra.mxu0 0.0
    %262 = vmatprep.subr.mxu0 0.0
    %263 = vmatpush1.msra.mxu0 0.0
    %264 = vmatprep.subr.mxu0 0.0
    %265 = vmatpush1.msra.mxu0 0.0
    %266 = vmatprep.subr.mxu0 0.0
    %267 = vmatpush1.msra.mxu0 0.0
    %268 = vmatprep.subr.mxu0 0.0
    %269 = vmatpush1.msra.mxu0 0.0
    %270 = vmatprep.subr.mxu0 0.0
    %271 = vmatpush1.msra.mxu0 0.0
    %272 = vmatprep.subr.mxu0 0.0
    %273 = vmatpush1.msra.mxu0 0.0
    %274 = vmatprep.subr.mxu0 0.0
    %275 = vmatpush1.msra.mxu0 0.0
    %276 = vmatprep.subr.mxu0 0.0
    %277 = vmatpush1.msra.mxu0 0.0
    %278 = vmatprep.subr.mxu0 0.0
    %279 = vmatpush1.msra.mxu0 0.0
    %280 = vmatprep.subr.mxu0 0.0
    %281 = vmatpush1.msra.mxu0 0.0
    %282 = vmatprep.subr.mxu0 0.0
    %283 = vmatpush1.msra.mxu0 0.0
    %284 = vmatprep.subr.mxu0 0.0
    %285 = vmatpush1.msra.mxu0 0.0
    %286 = vmatprep.subr.mxu0 0.0
    %287 = vmatpush1.msra.mxu0 0.0
    %288 = vmatprep.subr.mxu0 0.0
    %289 = vmatpush1.msra.mxu0 0.0
    %290 = vmatprep.subr.mxu0 0.0
    %291 = vmatpush1.msra.mxu0 0.0
    %292 = vmatprep.subr.mxu0 0.0
    %293 = vmatpush1.msra.mxu0 0.0
    %294 = vmatprep.subr.mxu0 0.0
    %295 = vmatpush1.msra.mxu0 0.0
    %296 = vmatprep.subr.mxu0 0.0
    %297 = vmatpush1.msra.mxu0 0.0
    %298 = vmatprep.subr.mxu0 0.0
    %299 = vmatpush1.msra.mxu0 0.0
    %300 = vmatprep.subr.mxu0 0.0
    %301 = vmatpush1.msra.mxu0 0.0
    %302 = vmatprep.subr.mxu0 0.0
    %303 = vmatpush1.msra.mxu0 0.0
    %304 = vmatprep.subr.mxu0 0.0
    %305 = vmatpush1.msra.mxu0 0.0
    %306 = vmatprep.mubr.f32.mxu0 0.0
    %307 = vmatmul.mubr.f32.gmra.mrb[0].mxu0 %v227
    %v308 = vpop.f32.mrb[0].mxu0
    %v309 = vadd.f32 0.0, %v308
    %v310 = vpop.f32.mrb[0].mxu0
    %311 = vmatprep.mubr.f32.mxu0 0.0
    %312 = vmatmul.mubr.f32.gmra.mrb[0].mxu0 %v230
    %v313 = vpop.f32.mrb[0].mxu0
    %v314 = vadd.f32 0.0, %v313
    %v315 = vpop.f32.mrb[0].mxu0
    %316 = vmatprep.mubr.f32.mxu0 0.0
    %317 = vmatmul.mubr.f32.gmra.mrb[0].mxu0 %v233
    %v318 = vpop.f32.mrb[0].mxu0
    %v319 = vadd.f32 0.0, %v318
    %v320 = vpop.f32.mrb[0].mxu0
    %321 = vmatprep.mubr.f32.mxu0 0.0
    %322 = vmatmul.mubr.f32.gmra.mrb[0].mxu0 %v236
    %v323 = vpop.f32.mrb[0].mxu0
    %v324 = vadd.f32 0.0, %v323
    %v325 = vpop.f32.mrb[0].mxu0
    %326 = vdwg.mxu0
    %v328 = vsel %vm79, %v38, 0
    %330 = vmatprep.subr.mxu0 0.0
    %331 = vmatpush1.msra.mxu0 %v309
    %332 = vmatprep.subr.mxu0 0.0
    %333 = vmatpush1.msra.mxu0 %v314
    %334 = vmatprep.subr.mxu0 0.0
    %335 = vmatpush1.msra.mxu0 %v319
    %336 = vmatprep.subr.mxu0 0.0
    %337 = vmatpush1.msra.mxu0 %v324
    %338 = vmatprep.subr.mxu0 0.0
    %339 = vmatpush1.msra.mxu0 0.0
    %340 = vmatprep.subr.mxu0 0.0
    %341 = vmatpush1.msra.mxu0 0.0
    %342 = vmatprep.subr.mxu0 0.0
    %343 = vmatpush1.msra.mxu0 0.0
    %344 = vmatprep.subr.mxu0 0.0
    %345 = vmatpush1.msra.mxu0 0.0
    %346 = vmatprep.subr.mxu0 0.0
    %347 = vmatpush1.msra.mxu0 0.0
    %348 = vmatprep.subr.mxu0 0.0
    %349 = vmatpush1.msra.mxu0 0.0
    %350 = vmatprep.subr.mxu0 0.0
    %351 = vmatpush1.msra.mxu0 0.0
    %352 = vmatprep.subr.mxu0 0.0
    %353 = vmatpush1.msra.mxu0 0.0
    %354 = vmatprep.subr.mxu0 0.0
    %355 = vmatpush1.msra.mxu0 0.0
    %356 = vmatprep.subr.mxu0 0.0
    %357 = vmatpush1.msra.mxu0 0.0
    %358 = vmatprep.subr.mxu0 0.0
    %359 = vmatpush1.msra.mxu0 0.0
    %360 = vmatprep.subr.mxu0 0.0
    %361 = vmatpush1.msra.mxu0 0.0
    %362 = vmatprep.subr.mxu0 0.0
    %363 = vmatpush1.msra.mxu0 0.0
    %364 = vmatprep.subr.mxu0 0.0
    %365 = vmatpush1.msra.mxu0 0.0
    %366 = vmatprep.subr.mxu0 0.0
    %367 = vmatpush1.msra.mxu0 0.0
    %368 = vmatprep.subr.mxu0 0.0
    %369 = vmatpush1.msra.mxu0 0.0
    %370 = vmatprep.subr.mxu0 0.0
    %371 = vmatpush1.msra.mxu0 0.0
    %372 = vmatprep.subr.mxu0 0.0
    %373 = vmatpush1.msra.mxu0 0.0
    %374 = vmatprep.subr.mxu0 0.0
    %375 = vmatpush1.msra.mxu0 0.0
    %376 = vmatprep.subr.mxu0 0.0
    %377 = vmatpush1.msra.mxu0 0.0
    %378 = vmatprep.subr.mxu0 0.0
    %379 = vmatpush1.msra.mxu0 0.0
    %380 = vmatprep.subr.mxu0 0.0
    %381 = vmatpush1.msra.mxu0 0.0
    %382 = vmatprep.subr.mxu0 0.0
    %383 = vmatpush1.msra.mxu0 0.0
    %384 = vmatprep.subr.mxu0 0.0
    %385 = vmatpush1.msra.mxu0 0.0
    %386 = vmatprep.subr.mxu0 0.0
    %387 = vmatpush1.msra.mxu0 0.0
    %388 = vmatprep.subr.mxu0 0.0
    %389 = vmatpush1.msra.mxu0 0.0
    %390 = vmatprep.subr.mxu0 0.0
    %391 = vmatpush1.msra.mxu0 0.0
    %392 = vmatprep.subr.mxu0 0.0
    %393 = vmatpush1.msra.mxu0 0.0
    %394 = vmatprep.mubr.f32.mxu0 0.0
    %395 = vmatmul.mubr.f32.gmra.mrb[0].mxu0 %v328
    %v396 = vpop.f32.mrb[0].mxu0
    %v397 = vadd.f32 0.0, %v396
    %v398 = vpop.f32.mrb[0].mxu0
    %399 = vdwg.mxu0
    %v400 = vld [vmem:[%s3] sm:$0xff]
    %v401 = vld [vmem:[%s3 + $0x8] sm:$0xff]
    %v402 = vld [vmem:[%s3 + $0x10] sm:$0xff]
    %v403 = vld [vmem:[%s3 + $0x18] sm:$0xff]
    %v405 = vsel %vm79, %v42, 0
    %407 = vmatprep.subr.mxu0 0.0
    %408 = vmatpush1.msra.mxu0 %v309
    %409 = vmatprep.subr.mxu0 0.0
    %410 = vmatpush1.msra.mxu0 %v314
    %411 = vmatprep.subr.mxu0 0.0
    %412 = vmatpush1.msra.mxu0 %v319
    %413 = vmatprep.subr.mxu0 0.0
    %414 = vmatpush1.msra.mxu0 %v324
    %415 = vmatprep.subr.mxu0 0.0
    %416 = vmatpush1.msra.mxu0 0.0
    %417 = vmatprep.subr.mxu0 0.0
    %418 = vmatpush1.msra.mxu0 0.0
    %419 = vmatprep.subr.mxu0 0.0
    %420 = vmatpush1.msra.mxu0 0.0
    %421 = vmatprep.subr.mxu0 0.0
    %422 = vmatpush1.msra.mxu0 0.0
    %423 = vmatprep.subr.mxu0 0.0
    %424 = vmatpush1.msra.mxu0 0.0
    %425 = vmatprep.subr.mxu0 0.0
    %426 = vmatpush1.msra.mxu0 0.0
    %427 = vmatprep.subr.mxu0 0.0
    %428 = vmatpush1.msra.mxu0 0.0
    %429 = vmatprep.subr.mxu0 0.0
    %430 = vmatpush1.msra.mxu0 0.0
    %431 = vmatprep.subr.mxu0 0.0
    %432 = vmatpush1.msra.mxu0 0.0
    %433 = vmatprep.subr.mxu0 0.0
    %434 = vmatpush1.msra.mxu0 0.0
    %435 = vmatprep.subr.mxu0 0.0
    %436 = vmatpush1.msra.mxu0 0.0
    %437 = vmatprep.subr.mxu0 0.0
    %438 = vmatpush1.msra.mxu0 0.0
    %439 = vmatprep.subr.mxu0 0.0
    %440 = vmatpush1.msra.mxu0 0.0
    %441 = vmatprep.subr.mxu0 0.0
    %442 = vmatpush1.msra.mxu0 0.0
    %443 = vmatprep.subr.mxu0 0.0
    %444 = vmatpush1.msra.mxu0 0.0
    %445 = vmatprep.subr.mxu0 0.0
    %446 = vmatpush1.msra.mxu0 0.0
    %447 = vmatprep.subr.mxu0 0.0
    %448 = vmatpush1.msra.mxu0 0.0
    %449 = vmatprep.subr.mxu0 0.0
    %450 = vmatpush1.msra.mxu0 0.0
    %451 = vmatprep.subr.mxu0 0.0
    %452 = vmatpush1.msra.mxu0 0.0
    %453 = vmatprep.subr.mxu0 0.0
    %454 = vmatpush1.msra.mxu0 0.0
    %455 = vmatprep.subr.mxu0 0.0
    %456 = vmatpush1.msra.mxu0 0.0
    %457 = vmatprep.subr.mxu0 0.0
    %458 = vmatpush1.msra.mxu0 0.0
    %459 = vmatprep.subr.mxu0 0.0
    %460 = vmatpush1.msra.mxu0 0.0
    %461 = vmatprep.subr.mxu0 0.0
    %462 = vmatpush1.msra.mxu0 0.0
    %463 = vmatprep.subr.mxu0 0.0
    %464 = vmatpush1.msra.mxu0 0.0
    %465 = vmatprep.subr.mxu0 0.0
    %466 = vmatpush1.msra.mxu0 0.0
    %467 = vmatprep.subr.mxu0 0.0
    %468 = vmatpush1.msra.mxu0 0.0
    %469 = vmatprep.subr.mxu0 0.0
    %470 = vmatpush1.msra.mxu0 0.0
    %471 = vmatprep.mubr.f32.mxu0 0.0
    %472 = vmatmul.mubr.f32.gmra.mrb[0].mxu0 %v405
    %v473 = vpop.f32.mrb[0].mxu0
    %v474 = vadd.f32 0.0, %v473
    %v475 = vpop.f32.mrb[0].mxu0
    %476 = vdwg.mxu0
    %s477 = scalar_lea.vmem %s3, 32
    %v478 = vld [vmem:[%s477] sm:$0xff]
    %v479 = vld [vmem:[%s477 + $0x8] sm:$0xff]
    %v480 = vld [vmem:[%s477 + $0x10] sm:$0xff]
    %v481 = vld [vmem:[%s477 + $0x18] sm:$0xff]
    %v483 = vsel %vm164, %v474, 0
    %v486 = vsel %vm164, %v478, 0
    %v489 = vsel %vm164, %v479, 0
    %v492 = vsel %vm164, %v480, 0
    %v495 = vsel %vm164, %v481, 0
    %497 = vmatprep.subr.mxu0 0.0
    %498 = vmatpush1.xpose.msra.mxu0 %v486
    %499 = vmatprep.subr.mxu0 0.0
    %500 = vmatpush1.xpose.msra.mxu0 %v489
    %501 = vmatprep.subr.mxu0 0.0
    %502 = vmatpush1.xpose.msra.mxu0 %v492
    %503 = vmatprep.subr.mxu0 0.0
    %504 = vmatpush1.xpose.msra.mxu0 %v495
    %505 = vmatprep.subr.mxu0 0.0
    %506 = vmatpush1.xpose.msra.mxu0 0.0
    %507 = vmatprep.subr.mxu0 0.0
    %508 = vmatpush1.xpose.msra.mxu0 0.0
    %509 = vmatprep.subr.mxu0 0.0
    %510 = vmatpush1.xpose.msra.mxu0 0.0
    %511 = vmatprep.subr.mxu0 0.0
    %512 = vmatpush1.xpose.msra.mxu0 0.0
    %513 = vmatprep.subr.mxu0 0.0
    %514 = vmatpush1.xpose.msra.mxu0 0.0
    %515 = vmatprep.subr.mxu0 0.0
    %516 = vmatpush1.xpose.msra.mxu0 0.0
    %517 = vmatprep.subr.mxu0 0.0
    %518 = vmatpush1.xpose.msra.mxu0 0.0
    %519 = vmatprep.subr.mxu0 0.0
    %520 = vmatpush1.xpose.msra.mxu0 0.0
    %521 = vmatprep.subr.mxu0 0.0
    %522 = vmatpush1.xpose.msra.mxu0 0.0
    %523 = vmatprep.subr.mxu0 0.0
    %524 = vmatpush1.xpose.msra.mxu0 0.0
    %525 = vmatprep.subr.mxu0 0.0
    %526 = vmatpush1.xpose.msra.mxu0 0.0
    %527 = vmatprep.subr.mxu0 0.0
    %528 = vmatpush1.xpose.msra.mxu0 0.0
    %529 = vmatprep.subr.mxu0 0.0
    %530 = vmatpush1.xpose.msra.mxu0 0.0
    %531 = vmatprep.subr.mxu0 0.0
    %532 = vmatpush1.xpose.msra.mxu0 0.0
    %533 = vmatprep.subr.mxu0 0.0
    %534 = vmatpush1.xpose.msra.mxu0 0.0
    %535 = vmatprep.subr.mxu0 0.0
    %536 = vmatpush1.xpose.msra.mxu0 0.0
    %537 = vmatprep.subr.mxu0 0.0
    %538 = vmatpush1.xpose.msra.mxu0 0.0
    %539 = vmatprep.subr.mxu0 0.0
    %540 = vmatpush1.xpose.msra.mxu0 0.0
    %541 = vmatprep.subr.mxu0 0.0
    %542 = vmatpush1.xpose.msra.mxu0 0.0
    %543 = vmatprep.subr.mxu0 0.0
    %544 = vmatpush1.xpose.msra.mxu0 0.0
    %545 = vmatprep.subr.mxu0 0.0
    %546 = vmatpush1.xpose.msra.mxu0 0.0
    %547 = vmatprep.subr.mxu0 0.0
    %548 = vmatpush1.xpose.msra.mxu0 0.0
    %549 = vmatprep.subr.mxu0 0.0
    %550 = vmatpush1.xpose.msra.mxu0 0.0
    %551 = vmatprep.subr.mxu0 0.0
    %552 = vmatpush1.xpose.msra.mxu0 0.0
    %553 = vmatprep.subr.mxu0 0.0
    %554 = vmatpush1.xpose.msra.mxu0 0.0
    %555 = vmatprep.subr.mxu0 0.0
    %556 = vmatpush1.xpose.msra.mxu0 0.0
    %557 = vmatprep.subr.mxu0 0.0
    %558 = vmatpush1.xpose.msra.mxu0 0.0
    %559 = vmatprep.subr.mxu0 0.0
    %560 = vmatpush1.xpose.msra.mxu0 0.0
    %561 = vmatprep.mubr.f32.mxu0 0.0
    %562 = vmatmul.mubr.f32.gmra.mrb[0].mxu0 %v483
    %v563 = vpop.f32.mrb[0].mxu0
    %v564 = vadd.f32 0.0, %v563
    %v565 = vpop.f32.mrb[0].mxu0
    %566 = vdwg.mxu0
    %v568 = vsel %vm164, %v397, 0
    %v571 = vsel %vm164, %v400, 0
    %v574 = vsel %vm164, %v401, 0
    %v577 = vsel %vm164, %v402, 0
    %v580 = vsel %vm164, %v403, 0
    %582 = vmatprep.subr.mxu0 0.0
    %583 = vmatpush1.xpose.msra.mxu0 %v571
    %584 = vmatprep.subr.mxu0 0.0
    %585 = vmatpush1.xpose.msra.mxu0 %v574
    %586 = vmatprep.subr.mxu0 0.0
    %587 = vmatpush1.xpose.msra.mxu0 %v577
    %588 = vmatprep.subr.mxu0 0.0
    %589 = vmatpush1.xpose.msra.mxu0 %v580
    %590 = vmatprep.subr.mxu0 0.0
    %591 = vmatpush1.xpose.msra.mxu0 0.0
    %592 = vmatprep.subr.mxu0 0.0
    %593 = vmatpush1.xpose.msra.mxu0 0.0
    %594 = vmatprep.subr.mxu0 0.0
    %595 = vmatpush1.xpose.msra.mxu0 0.0
    %596 = vmatprep.subr.mxu0 0.0
    %597 = vmatpush1.xpose.msra.mxu0 0.0
    %598 = vmatprep.subr.mxu0 0.0
    %599 = vmatpush1.xpose.msra.mxu0 0.0
    %600 = vmatprep.subr.mxu0 0.0
    %601 = vmatpush1.xpose.msra.mxu0 0.0
    %602 = vmatprep.subr.mxu0 0.0
    %603 = vmatpush1.xpose.msra.mxu0 0.0
    %604 = vmatprep.subr.mxu0 0.0
    %605 = vmatpush1.xpose.msra.mxu0 0.0
    %606 = vmatprep.subr.mxu0 0.0
    %607 = vmatpush1.xpose.msra.mxu0 0.0
    %608 = vmatprep.subr.mxu0 0.0
    %609 = vmatpush1.xpose.msra.mxu0 0.0
    %610 = vmatprep.subr.mxu0 0.0
    %611 = vmatpush1.xpose.msra.mxu0 0.0
    %612 = vmatprep.subr.mxu0 0.0
    %613 = vmatpush1.xpose.msra.mxu0 0.0
    %614 = vmatprep.subr.mxu0 0.0
    %615 = vmatpush1.xpose.msra.mxu0 0.0
    %616 = vmatprep.subr.mxu0 0.0
    %617 = vmatpush1.xpose.msra.mxu0 0.0
    %618 = vmatprep.subr.mxu0 0.0
    %619 = vmatpush1.xpose.msra.mxu0 0.0
    %620 = vmatprep.subr.mxu0 0.0
    %621 = vmatpush1.xpose.msra.mxu0 0.0
    %622 = vmatprep.subr.mxu0 0.0
    %623 = vmatpush1.xpose.msra.mxu0 0.0
    %624 = vmatprep.subr.mxu0 0.0
    %625 = vmatpush1.xpose.msra.mxu0 0.0
    %626 = vmatprep.subr.mxu0 0.0
    %627 = vmatpush1.xpose.msra.mxu0 0.0
    %628 = vmatprep.subr.mxu0 0.0
    %629 = vmatpush1.xpose.msra.mxu0 0.0
    %630 = vmatprep.subr.mxu0 0.0
    %631 = vmatpush1.xpose.msra.mxu0 0.0
    %632 = vmatprep.subr.mxu0 0.0
    %633 = vmatpush1.xpose.msra.mxu0 0.0
    %634 = vmatprep.subr.mxu0 0.0
    %635 = vmatpush1.xpose.msra.mxu0 0.0
    %636 = vmatprep.subr.mxu0 0.0
    %637 = vmatpush1.xpose.msra.mxu0 0.0
    %638 = vmatprep.subr.mxu0 0.0
    %639 = vmatpush1.xpose.msra.mxu0 0.0
    %640 = vmatprep.subr.mxu0 0.0
    %641 = vmatpush1.xpose.msra.mxu0 0.0
    %642 = vmatprep.subr.mxu0 0.0
    %643 = vmatpush1.xpose.msra.mxu0 0.0
    %644 = vmatprep.subr.mxu0 0.0
    %645 = vmatpush1.xpose.msra.mxu0 0.0
    %646 = vmatprep.mubr.f32.mxu0 0.0
    %647 = vmatmul.mubr.f32.gmra.mrb[0].mxu0 %v568
    %v648 = vpop.f32.mrb[0].mxu0
    %v649 = vadd.f32 %v564, %v648
    %v650 = vpop.f32.mrb[0].mxu0
    %651 = vdwg.mxu0
    %v653 = vsel %vm79, %v46, 0
    %655 = vmatprep.subr.mxu0 0.0
    %656 = vmatpush1.msra.mxu0 %v309
    %657 = vmatprep.subr.mxu0 0.0
    %658 = vmatpush1.msra.mxu0 %v314
    %659 = vmatprep.subr.mxu0 0.0
    %660 = vmatpush1.msra.mxu0 %v319
    %661 = vmatprep.subr.mxu0 0.0
    %662 = vmatpush1.msra.mxu0 %v324
    %663 = vmatprep.subr.mxu0 0.0
    %664 = vmatpush1.msra.mxu0 0.0
    %665 = vmatprep.subr.mxu0 0.0
    %666 = vmatpush1.msra.mxu0 0.0
    %667 = vmatprep.subr.mxu0 0.0
    %668 = vmatpush1.msra.mxu0 0.0
    %669 = vmatprep.subr.mxu0 0.0
    %670 = vmatpush1.msra.mxu0 0.0
    %671 = vmatprep.subr.mxu0 0.0
    %672 = vmatpush1.msra.mxu0 0.0
    %673 = vmatprep.subr.mxu0 0.0
    %674 = vmatpush1.msra.mxu0 0.0
    %675 = vmatprep.subr.mxu0 0.0
    %676 = vmatpush1.msra.mxu0 0.0
    %677 = vmatprep.subr.mxu0 0.0
    %678 = vmatpush1.msra.mxu0 0.0
    %679 = vmatprep.subr.mxu0 0.0
    %680 = vmatpush1.msra.mxu0 0.0
    %681 = vmatprep.subr.mxu0 0.0
    %682 = vmatpush1.msra.mxu0 0.0
    %683 = vmatprep.subr.mxu0 0.0
    %684 = vmatpush1.msra.mxu0 0.0
    %685 = vmatprep.subr.mxu0 0.0
    %686 = vmatpush1.msra.mxu0 0.0
    %687 = vmatprep.subr.mxu0 0.0
    %688 = vmatpush1.msra.mxu0 0.0
    %689 = vmatprep.subr.mxu0 0.0
    %690 = vmatpush1.msra.mxu0 0.0
    %691 = vmatprep.subr.mxu0 0.0
    %692 = vmatpush1.msra.mxu0 0.0
    %693 = vmatprep.subr.mxu0 0.0
    %694 = vmatpush1.msra.mxu0 0.0
    %695 = vmatprep.subr.mxu0 0.0
    %696 = vmatpush1.msra.mxu0 0.0
    %697 = vmatprep.subr.mxu0 0.0
    %698 = vmatpush1.msra.mxu0 0.0
    %699 = vmatprep.subr.mxu0 0.0
    %700 = vmatpush1.msra.mxu0 0.0
    %701 = vmatprep.subr.mxu0 0.0
    %702 = vmatpush1.msra.mxu0 0.0
    %703 = vmatprep.subr.mxu0 0.0
    %704 = vmatpush1.msra.mxu0 0.0
    %705 = vmatprep.subr.mxu0 0.0
    %706 = vmatpush1.msra.mxu0 0.0
    %707 = vmatprep.subr.mxu0 0.0
    %708 = vmatpush1.msra.mxu0 0.0
    %709 = vmatprep.subr.mxu0 0.0
    %710 = vmatpush1.msra.mxu0 0.0
    %711 = vmatprep.subr.mxu0 0.0
    %712 = vmatpush1.msra.mxu0 0.0
    %713 = vmatprep.subr.mxu0 0.0
    %714 = vmatpush1.msra.mxu0 0.0
    %715 = vmatprep.subr.mxu0 0.0
    %716 = vmatpush1.msra.mxu0 0.0
    %717 = vmatprep.subr.mxu0 0.0
    %718 = vmatpush1.msra.mxu0 0.0
    %719 = vmatprep.mubr.f32.mxu0 0.0
    %720 = vmatmul.mubr.f32.gmra.mrb[0].mxu0 %v653
    %v721 = vpop.f32.mrb[0].mxu0
    %v722 = vadd.f32 0.0, %v721
    %v723 = vpop.f32.mrb[0].mxu0
    %724 = vdwg.mxu0
    %s725 = scalar_lea.vmem %s3, 64
    %v726 = vld [vmem:[%s725] sm:$0xff]
    %v727 = vld [vmem:[%s725 + $0x8] sm:$0xff]
    %v728 = vld [vmem:[%s725 + $0x10] sm:$0xff]
    %v729 = vld [vmem:[%s725 + $0x18] sm:$0xff]
    %v731 = vsel %vm164, %v722, 0
    %v734 = vsel %vm164, %v726, 0
    %v737 = vsel %vm164, %v727, 0
    %v740 = vsel %vm164, %v728, 0
    %v743 = vsel %vm164, %v729, 0
    %745 = vmatprep.subr.mxu0 0.0
    %746 = vmatpush1.xpose.msra.mxu0 %v734
    %747 = vmatprep.subr.mxu0 0.0
    %748 = vmatpush1.xpose.msra.mxu0 %v737
    %749 = vmatprep.subr.mxu0 0.0
    %750 = vmatpush1.xpose.msra.mxu0 %v740
    %751 = vmatprep.subr.mxu0 0.0
    %752 = vmatpush1.xpose.msra.mxu0 %v743
    %753 = vmatprep.subr.mxu0 0.0
    %754 = vmatpush1.xpose.msra.mxu0 0.0
    %755 = vmatprep.subr.mxu0 0.0
    %756 = vmatpush1.xpose.msra.mxu0 0.0
    %757 = vmatprep.subr.mxu0 0.0
    %758 = vmatpush1.xpose.msra.mxu0 0.0
    %759 = vmatprep.subr.mxu0 0.0
    %760 = vmatpush1.xpose.msra.mxu0 0.0
    %761 = vmatprep.subr.mxu0 0.0
    %762 = vmatpush1.xpose.msra.mxu0 0.0
    %763 = vmatprep.subr.mxu0 0.0
    %764 = vmatpush1.xpose.msra.mxu0 0.0
    %765 = vmatprep.subr.mxu0 0.0
    %766 = vmatpush1.xpose.msra.mxu0 0.0
    %767 = vmatprep.subr.mxu0 0.0
    %768 = vmatpush1.xpose.msra.mxu0 0.0
    %769 = vmatprep.subr.mxu0 0.0
    %770 = vmatpush1.xpose.msra.mxu0 0.0
    %771 = vmatprep.subr.mxu0 0.0
    %772 = vmatpush1.xpose.msra.mxu0 0.0
    %773 = vmatprep.subr.mxu0 0.0
    %774 = vmatpush1.xpose.msra.mxu0 0.0
    %775 = vmatprep.subr.mxu0 0.0
    %776 = vmatpush1.xpose.msra.mxu0 0.0
    %777 = vmatprep.subr.mxu0 0.0
    %778 = vmatpush1.xpose.msra.mxu0 0.0
    %779 = vmatprep.subr.mxu0 0.0
    %780 = vmatpush1.xpose.msra.mxu0 0.0
    %781 = vmatprep.subr.mxu0 0.0
    %782 = vmatpush1.xpose.msra.mxu0 0.0
    %783 = vmatprep.subr.mxu0 0.0
    %784 = vmatpush1.xpose.msra.mxu0 0.0
    %785 = vmatprep.subr.mxu0 0.0
    %786 = vmatpush1.xpose.msra.mxu0 0.0
    %787 = vmatprep.subr.mxu0 0.0
    %788 = vmatpush1.xpose.msra.mxu0 0.0
    %789 = vmatprep.subr.mxu0 0.0
    %790 = vmatpush1.xpose.msra.mxu0 0.0
    %791 = vmatprep.subr.mxu0 0.0
    %792 = vmatpush1.xpose.msra.mxu0 0.0
    %793 = vmatprep.subr.mxu0 0.0
    %794 = vmatpush1.xpose.msra.mxu0 0.0
    %795 = vmatprep.subr.mxu0 0.0
    %796 = vmatpush1.xpose.msra.mxu0 0.0
    %797 = vmatprep.subr.mxu0 0.0
    %798 = vmatpush1.xpose.msra.mxu0 0.0
    %799 = vmatprep.subr.mxu0 0.0
    %800 = vmatpush1.xpose.msra.mxu0 0.0
    %801 = vmatprep.subr.mxu0 0.0
    %802 = vmatpush1.xpose.msra.mxu0 0.0
    %803 = vmatprep.subr.mxu0 0.0
    %804 = vmatpush1.xpose.msra.mxu0 0.0
    %805 = vmatprep.subr.mxu0 0.0
    %806 = vmatpush1.xpose.msra.mxu0 0.0
    %807 = vmatprep.subr.mxu0 0.0
    %808 = vmatpush1.xpose.msra.mxu0 0.0
    %809 = vmatprep.mubr.f32.mxu0 0.0
    %810 = vmatmul.mubr.f32.gmra.mrb[0].mxu0 %v731
    %v811 = vpop.f32.mrb[0].mxu0
    %v812 = vadd.f32 0.0, %v811
    %v813 = vpop.f32.mrb[0].mxu0
    %814 = vdwg.mxu0
    %v815 = vadd.f32 %v649, %v812
    %v817 = vsel %vm79, %v50, 0
    %819 = vmatprep.subr.mxu0 0.0
    %820 = vmatpush1.msra.mxu0 %v309
    %821 = vmatprep.subr.mxu0 0.0
    %822 = vmatpush1.msra.mxu0 %v314
    %823 = vmatprep.subr.mxu0 0.0
    %824 = vmatpush1.msra.mxu0 %v319
    %825 = vmatprep.subr.mxu0 0.0
    %826 = vmatpush1.msra.mxu0 %v324
    %827 = vmatprep.subr.mxu0 0.0
    %828 = vmatpush1.msra.mxu0 0.0
    %829 = vmatprep.subr.mxu0 0.0
    %830 = vmatpush1.msra.mxu0 0.0
    %831 = vmatprep.subr.mxu0 0.0
    %832 = vmatpush1.msra.mxu0 0.0
    %833 = vmatprep.subr.mxu0 0.0
    %834 = vmatpush1.msra.mxu0 0.0
    %835 = vmatprep.subr.mxu0 0.0
    %836 = vmatpush1.msra.mxu0 0.0
    %837 = vmatprep.subr.mxu0 0.0
    %838 = vmatpush1.msra.mxu0 0.0
    %839 = vmatprep.subr.mxu0 0.0
    %840 = vmatpush1.msra.mxu0 0.0
    %841 = vmatprep.subr.mxu0 0.0
    %842 = vmatpush1.msra.mxu0 0.0
    %843 = vmatprep.subr.mxu0 0.0
    %844 = vmatpush1.msra.mxu0 0.0
    %845 = vmatprep.subr.mxu0 0.0
    %846 = vmatpush1.msra.mxu0 0.0
    %847 = vmatprep.subr.mxu0 0.0
    %848 = vmatpush1.msra.mxu0 0.0
    %849 = vmatprep.subr.mxu0 0.0
    %850 = vmatpush1.msra.mxu0 0.0
    %851 = vmatprep.subr.mxu0 0.0
    %852 = vmatpush1.msra.mxu0 0.0
    %853 = vmatprep.subr.mxu0 0.0
    %854 = vmatpush1.msra.mxu0 0.0
    %855 = vmatprep.subr.mxu0 0.0
    %856 = vmatpush1.msra.mxu0 0.0
    %857 = vmatprep.subr.mxu0 0.0
    %858 = vmatpush1.msra.mxu0 0.0
    %859 = vmatprep.subr.mxu0 0.0
    %860 = vmatpush1.msra.mxu0 0.0
    %861 = vmatprep.subr.mxu0 0.0
    %862 = vmatpush1.msra.mxu0 0.0
    %863 = vmatprep.subr.mxu0 0.0
    %864 = vmatpush1.msra.mxu0 0.0
    %865 = vmatprep.subr.mxu0 0.0
    %866 = vmatpush1.msra.mxu0 0.0
    %867 = vmatprep.subr.mxu0 0.0
    %868 = vmatpush1.msra.mxu0 0.0
    %869 = vmatprep.subr.mxu0 0.0
    %870 = vmatpush1.msra.mxu0 0.0
    %871 = vmatprep.subr.mxu0 0.0
    %872 = vmatpush1.msra.mxu0 0.0
    %873 = vmatprep.subr.mxu0 0.0
    %874 = vmatpush1.msra.mxu0 0.0
    %875 = vmatprep.subr.mxu0 0.0
    %876 = vmatpush1.msra.mxu0 0.0
    %877 = vmatprep.subr.mxu0 0.0
    %878 = vmatpush1.msra.mxu0 0.0
    %879 = vmatprep.subr.mxu0 0.0
    %880 = vmatpush1.msra.mxu0 0.0
    %881 = vmatprep.subr.mxu0 0.0
    %882 = vmatpush1.msra.mxu0 0.0
    %883 = vmatprep.mubr.f32.mxu0 0.0
    %884 = vmatmul.mubr.f32.gmra.mrb[0].mxu0 %v817
    %v885 = vpop.f32.mrb[0].mxu0
    %v886 = vadd.f32 0.0, %v885
    %v887 = vpop.f32.mrb[0].mxu0
    %888 = vdwg.mxu0
    %s889 = scalar_lea.vmem %s3, 96
    %v890 = vld [vmem:[%s889] sm:$0xff]
    %v891 = vld [vmem:[%s889 + $0x8] sm:$0xff]
    %v892 = vld [vmem:[%s889 + $0x10] sm:$0xff]
    %v893 = vld [vmem:[%s889 + $0x18] sm:$0xff]
    %v895 = vsel %vm164, %v886, 0
    %v898 = vsel %vm164, %v890, 0
    %v901 = vsel %vm164, %v891, 0
    %v904 = vsel %vm164, %v892, 0
    %v907 = vsel %vm164, %v893, 0
    %909 = vmatprep.subr.mxu0 0.0
    %910 = vmatpush1.xpose.msra.mxu0 %v898
    %911 = vmatprep.subr.mxu0 0.0
    %912 = vmatpush1.xpose.msra.mxu0 %v901
    %913 = vmatprep.subr.mxu0 0.0
    %914 = vmatpush1.xpose.msra.mxu0 %v904
    %915 = vmatprep.subr.mxu0 0.0
    %916 = vmatpush1.xpose.msra.mxu0 %v907
    %917 = vmatprep.subr.mxu0 0.0
    %918 = vmatpush1.xpose.msra.mxu0 0.0
    %919 = vmatprep.subr.mxu0 0.0
    %920 = vmatpush1.xpose.msra.mxu0 0.0
    %921 = vmatprep.subr.mxu0 0.0
    %922 = vmatpush1.xpose.msra.mxu0 0.0
    %923 = vmatprep.subr.mxu0 0.0
    %924 = vmatpush1.xpose.msra.mxu0 0.0
    %925 = vmatprep.subr.mxu0 0.0
    %926 = vmatpush1.xpose.msra.mxu0 0.0
    %927 = vmatprep.subr.mxu0 0.0
    %928 = vmatpush1.xpose.msra.mxu0 0.0
    %929 = vmatprep.subr.mxu0 0.0
    %930 = vmatpush1.xpose.msra.mxu0 0.0
    %931 = vmatprep.subr.mxu0 0.0
    %932 = vmatpush1.xpose.msra.mxu0 0.0
    %933 = vmatprep.subr.mxu0 0.0
    %934 = vmatpush1.xpose.msra.mxu0 0.0
    %935 = vmatprep.subr.mxu0 0.0
    %936 = vmatpush1.xpose.msra.mxu0 0.0
    %937 = vmatprep.subr.mxu0 0.0
    %938 = vmatpush1.xpose.msra.mxu0 0.0
    %939 = vmatprep.subr.mxu0 0.0
    %940 = vmatpush1.xpose.msra.mxu0 0.0
    %941 = vmatprep.subr.mxu0 0.0
    %942 = vmatpush1.xpose.msra.mxu0 0.0
    %943 = vmatprep.subr.mxu0 0.0
    %944 = vmatpush1.xpose.msra.mxu0 0.0
    %945 = vmatprep.subr.mxu0 0.0
    %946 = vmatpush1.xpose.msra.mxu0 0.0
    %947 = vmatprep.subr.mxu0 0.0
    %948 = vmatpush1.xpose.msra.mxu0 0.0
    %949 = vmatprep.subr.mxu0 0.0
    %950 = vmatpush1.xpose.msra.mxu0 0.0
    %951 = vmatprep.subr.mxu0 0.0
    %952 = vmatpush1.xpose.msra.mxu0 0.0
    %953 = vmatprep.subr.mxu0 0.0
    %954 = vmatpush1.xpose.msra.mxu0 0.0
    %955 = vmatprep.subr.mxu0 0.0
    %956 = vmatpush1.xpose.msra.mxu0 0.0
    %957 = vmatprep.subr.mxu0 0.0
    %958 = vmatpush1.xpose.msra.mxu0 0.0
    %959 = vmatprep.subr.mxu0 0.0
    %960 = vmatpush1.xpose.msra.mxu0 0.0
    %961 = vmatprep.subr.mxu0 0.0
    %962 = vmatpush1.xpose.msra.mxu0 0.0
    %963 = vmatprep.subr.mxu0 0.0
    %964 = vmatpush1.xpose.msra.mxu0 0.0
    %965 = vmatprep.subr.mxu0 0.0
    %966 = vmatpush1.xpose.msra.mxu0 0.0
    %967 = vmatprep.subr.mxu0 0.0
    %968 = vmatpush1.xpose.msra.mxu0 0.0
    %969 = vmatprep.subr.mxu0 0.0
    %970 = vmatpush1.xpose.msra.mxu0 0.0
    %971 = vmatprep.subr.mxu0 0.0
    %972 = vmatpush1.xpose.msra.mxu0 0.0
    %973 = vmatprep.mubr.f32.mxu0 0.0
    %974 = vmatmul.mubr.f32.gmra.mrb[0].mxu0 %v895
    %v975 = vpop.f32.mrb[0].mxu0
    %v976 = vadd.f32 0.0, %v975
    %v977 = vpop.f32.mrb[0].mxu0
    %978 = vdwg.mxu0
    %v979 = vadd.f32 %v815, %v976
    %v981 = vlaneseq
    %v982 = vshrl.u32 %v981, 7
    %v983 = vsub.s32 0, %v982
    %v984 = vrot.slane %v52, %v983
    %v986 = vadd.f32 %v979, %v984
    %v987 = vmax.f32 %v986, 0.0
    %v988 = vstv %s54
    %v990 = vsel %vm79, %v53, 0
    %v993 = vsel %vm79, %v987, 0
    %995 = vmatprep.subr.mxu0 0.0
    %996 = vmatpush1.xpose.msra.mxu0 %v993
    %997 = vmatprep.subr.mxu0 0.0
    %998 = vmatpush1.xpose.msra.mxu0 0.0
    %999 = vmatprep.subr.mxu0 0.0
    %1000 = vmatpush1.xpose.msra.mxu0 0.0
    %1001 = vmatprep.subr.mxu0 0.0
    %1002 = vmatpush1.xpose.msra.mxu0 0.0
    %1003 = vmatprep.subr.mxu0 0.0
    %1004 = vmatpush1.xpose.msra.mxu0 0.0
    %1005 = vmatprep.subr.mxu0 0.0
    %1006 = vmatpush1.xpose.msra.mxu0 0.0
    %1007 = vmatprep.subr.mxu0 0.0
    %1008 = vmatpush1.xpose.msra.mxu0 0.0
    %1009 = vmatprep.subr.mxu0 0.0
    %1010 = vmatpush1.xpose.msra.mxu0 0.0
    %1011 = vmatprep.subr.mxu0 0.0
    %1012 = vmatpush1.xpose.msra.mxu0 0.0
    %1013 = vmatprep.subr.mxu0 0.0
    %1014 = vmatpush1.xpose.msra.mxu0 0.0
    %1015 = vmatprep.subr.mxu0 0.0
    %1016 = vmatpush1.xpose.msra.mxu0 0.0
    %1017 = vmatprep.subr.mxu0 0.0
    %1018 = vmatpush1.xpose.msra.mxu0 0.0
    %1019 = vmatprep.subr.mxu0 0.0
    %1020 = vmatpush1.xpose.msra.mxu0 0.0
    %1021 = vmatprep.subr.mxu0 0.0
    %1022 = vmatpush1.xpose.msra.mxu0 0.0
    %1023 = vmatprep.subr.mxu0 0.0
    %1024 = vmatpush1.xpose.msra.mxu0 0.0
    %1025 = vmatprep.subr.mxu0 0.0
    %1026 = vmatpush1.xpose.msra.mxu0 0.0
    %1027 = vmatprep.subr.mxu0 0.0
    %1028 = vmatpush1.xpose.msra.mxu0 0.0
    %1029 = vmatprep.subr.mxu0 0.0
    %1030 = vmatpush1.xpose.msra.mxu0 0.0
    %1031 = vmatprep.subr.mxu0 0.0
    %1032 = vmatpush1.xpose.msra.mxu0 0.0
    %1033 = vmatprep.subr.mxu0 0.0
    %1034 = vmatpush1.xpose.msra.mxu0 0.0
    %1035 = vmatprep.subr.mxu0 0.0
    %1036 = vmatpush1.xpose.msra.mxu0 0.0
    %1037 = vmatprep.subr.mxu0 0.0
    %1038 = vmatpush1.xpose.msra.mxu0 0.0
    %1039 = vmatprep.subr.mxu0 0.0
    %1040 = vmatpush1.xpose.msra.mxu0 0.0
    %1041 = vmatprep.subr.mxu0 0.0
    %1042 = vmatpush1.xpose.msra.mxu0 0.0
    %1043 = vmatprep.subr.mxu0 0.0
    %1044 = vmatpush1.xpose.msra.mxu0 0.0
    %1045 = vmatprep.subr.mxu0 0.0
    %1046 = vmatpush1.xpose.msra.mxu0 0.0
    %1047 = vmatprep.subr.mxu0 0.0
    %1048 = vmatpush1.xpose.msra.mxu0 0.0
    %1049 = vmatprep.subr.mxu0 0.0
    %1050 = vmatpush1.xpose.msra.mxu0 0.0
    %1051 = vmatprep.subr.mxu0 0.0
    %1052 = vmatpush1.xpose.msra.mxu0 0.0
    %1053 = vmatprep.subr.mxu0 0.0
    %1054 = vmatpush1.xpose.msra.mxu0 0.0
    %1055 = vmatprep.subr.mxu0 0.0
    %1056 = vmatpush1.xpose.msra.mxu0 0.0
    %1057 = vmatprep.subr.mxu0 0.0
    %1058 = vmatpush1.xpose.msra.mxu0 0.0
    %1059 = vmatprep.mubr.f32.mxu0 0.0
    %1060 = vmatmul.mubr.f32.gmra.mrb[0].mxu0 %v990
    %v1061 = vpop.f32.mrb[0].mxu0
    %v1062 = vadd.f32 %v988, %v1061
    %v1063 = vpop.f32.mrb[0].mxu0
    %1064 = vdwg.mxu0
    %vm1065 = vcmask 57344
    %1066 = vst.msk [vmem:[#allocation3] sm:$0x1] %vm1065, %v1062
    %v1067 = vsel %vm1065, %v1062, -inf
    %1068 = vmax.xlane.f32.xlu0 %v1067
    %v1069 = vpop.xlane.xlu0 %1068
    %v1070 = vsub.f32 %v1062, %v1069
    %v1071 = vmul.f32 %v1070, 1.442695
    %v1072 = vpow.pop %v1071
    %v1073 = vsel %vm1065, %v1072, 0.0
    %1074 = vadd.xlane.f32.xlu0 %v1073
    %v1075 = vpop.xlane.xlu0 %1074
    %v1076 = vrcp.pop %v1075
    %v1077 = vmul.f32 %v1072, %v1076
    %1078 = vst.msk [vmem:[#allocation5] sm:$0x1] %vm1065, %v1077
    %s1079 = scalar_lea.vmem %s0, 16
    %v1080 = vld [vmem:[%s1079] sm:$0xff]
    %v1081 = vld [vmem:[%s1079 + $0x8] sm:$0x3f]
    %s1082 = scalar_lea.vmem %s1, 16
    %v1083 = vld [vmem:[%s1082] sm:$0xff]
    %v1084 = vld [vmem:[%s1082 + $0x8] sm:$0x3f]
    %v1085 = vmul.f32 %v1080, %v1083
    %v1086 = vmul.f32 %v1081, %v1084
    %1089 = vrot.lane.b32.xlu0 %v1085, 96
    %v1090 = vpop.permute.xlu0 %1089
    %1091 = vrot.lane.b32.xlu0 %v1086, 96
    %v1092 = vpop.permute.xlu0 %1091
    %v1095 = vmax.f32 %v1085, %v1090
    %v1096 = vmax.f32 %v1086, %v1092
    %1097 = vrot.lane.b32.xlu0 %v1085, 64
    %v1098 = vpop.permute.xlu0 %1097
    %1099 = vrot.lane.b32.xlu0 %v1086, 64
    %v1100 = vpop.permute.xlu0 %1099
    %v1103 = vmax.f32 %v1095, %v1098
    %v1104 = vmax.f32 %v1096, %v1100
    %v1106 = vsel %vm79, %v1103, 0
    %v1109 = vsel %vm79, %v1104, 0
    %1111 = vmatprep.subr.mxu0 0.0
    %1112 = vmatpush1.xpose.msra.mxu0 %v87
    %1113 = vmatprep.subr.mxu0 0.0
    %1114 = vmatpush1.xpose.msra.mxu0 0.0
    %1115 = vmatprep.subr.mxu0 0.0
    %1116 = vmatpush1.xpose.msra.mxu0 0.0
    %1117 = vmatprep.subr.mxu0 0.0
    %1118 = vmatpush1.xpose.msra.mxu0 0.0
    %1119 = vmatprep.subr.mxu0 0.0
    %1120 = vmatpush1.xpose.msra.mxu0 0.0
    %1121 = vmatprep.subr.mxu0 0.0
    %1122 = vmatpush1.xpose.msra.mxu0 0.0
    %1123 = vmatprep.subr.mxu0 0.0
    %1124 = vmatpush1.xpose.msra.mxu0 0.0
    %1125 = vmatprep.subr.mxu0 0.0
    %1126 = vmatpush1.xpose.msra.mxu0 0.0
    %1127 = vmatprep.subr.mxu0 0.0
    %1128 = vmatpush1.xpose.msra.mxu0 0.0
    %1129 = vmatprep.subr.mxu0 0.0
    %1130 = vmatpush1.xpose.msra.mxu0 0.0
    %1131 = vmatprep.subr.mxu0 0.0
    %1132 = vmatpush1.xpose.msra.mxu0 0.0
    %1133 = vmatprep.subr.mxu0 0.0
    %1134 = vmatpush1.xpose.msra.mxu0 0.0
    %1135 = vmatprep.subr.mxu0 0.0
    %1136 = vmatpush1.xpose.msra.mxu0 0.0
    %1137 = vmatprep.subr.mxu0 0.0
    %1138 = vmatpush1.xpose.msra.mxu0 0.0
    %1139 = vmatprep.subr.mxu0 0.0
    %1140 = vmatpush1.xpose.msra.mxu0 0.0
    %1141 = vmatprep.subr.mxu0 0.0
    %1142 = vmatpush1.xpose.msra.mxu0 0.0
    %1143 = vmatprep.subr.mxu0 0.0
    %1144 = vmatpush1.xpose.msra.mxu0 0.0
    %1145 = vmatprep.subr.mxu0 0.0
    %1146 = vmatpush1.xpose.msra.mxu0 0.0
    %1147 = vmatprep.subr.mxu0 0.0
    %1148 = vmatpush1.xpose.msra.mxu0 0.0
    %1149 = vmatprep.subr.mxu0 0.0
    %1150 = vmatpush1.xpose.msra.mxu0 0.0
    %1151 = vmatprep.subr.mxu0 0.0
    %1152 = vmatpush1.xpose.msra.mxu0 0.0
    %1153 = vmatprep.subr.mxu0 0.0
    %1154 = vmatpush1.xpose.msra.mxu0 0.0
    %1155 = vmatprep.subr.mxu0 0.0
    %1156 = vmatpush1.xpose.msra.mxu0 0.0
    %1157 = vmatprep.subr.mxu0 0.0
    %1158 = vmatpush1.xpose.msra.mxu0 0.0
    %1159 = vmatprep.subr.mxu0 0.0
    %1160 = vmatpush1.xpose.msra.mxu0 0.0
    %1161 = vmatprep.subr.mxu0 0.0
    %1162 = vmatpush1.xpose.msra.mxu0 0.0
    %1163 = vmatprep.subr.mxu0 0.0
    %1164 = vmatpush1.xpose.msra.mxu0 0.0
    %1165 = vmatprep.subr.mxu0 0.0
    %1166 = vmatpush1.xpose.msra.mxu0 0.0
    %1167 = vmatprep.subr.mxu0 0.0
    %1168 = vmatpush1.xpose.msra.mxu0 0.0
    %1169 = vmatprep.subr.mxu0 0.0
    %1170 = vmatpush1.xpose.msra.mxu0 0.0
    %1171 = vmatprep.subr.mxu0 0.0
    %1172 = vmatpush1.xpose.msra.mxu0 0.0
    %1173 = vmatprep.subr.mxu0 0.0
    %1174 = vmatpush1.xpose.msra.mxu0 0.0
    %1175 = vmatprep.mubr.f32.mxu0 0.0
    %1176 = vmatmul.mubr.f32.gmra.mrb[0].mxu0 %v1106
    %v1177 = vpop.f32.mrb[0].mxu0
    %v1178 = vadd.f32 0.0, %v1177
    %v1179 = vpop.f32.mrb[0].mxu0
    %1180 = vmatprep.mubr.f32.mxu0 0.0
    %1181 = vmatmul.mubr.f32.gmra.mrb[0].mxu0 %v1109
    %v1182 = vpop.f32.mrb[0].mxu0
    %v1183 = vadd.f32 0.0, %v1182
    %v1184 = vpop.f32.mrb[0].mxu0
    %1185 = vdwg.mxu0
    %v1186 = vsel %vm164, %v1178, -inf
    %v1187 = vsel %vm166, %v1183, -inf
    %v1188 = vmax.f32 %v1186, %v1187
    %v1189 = vrot.slane %v1188, 4
    %v1190 = vmax.f32 %v1188, %v1189
    %v1191 = vrot.slane %v1190, 2
    %v1192 = vmax.f32 %v1190, %v1191
    %v1193 = vrot.slane %v1192, 1
    %v1194 = vmax.f32 %v1192, %v1193
    %v1195 = vsub.f32 %v1178, %v1194
    %v1196 = vsub.f32 %v1183, %v1194
    %v1197 = vmul.f32 %v1195, 1.442695
    %v1198 = vpow.pop %v1197
    %v1199 = vmul.f32 %v1196, 1.442695
    %v1200 = vpow.pop %v1199
    %v1201 = vsel %vm164, %v1198, 0.0
    %v1202 = vsel %vm166, %v1200, 0.0
    %v1203 = vadd.f32 %v1201, %v1202
    %v1204 = vrot.slane %v1203, 4
    %v1205 = vadd.f32 %v1203, %v1204
    %v1206 = vrot.slane %v1205, 2
    %v1207 = vadd.f32 %v1205, %v1206
    %v1208 = vrot.slane %v1207, 1
    %v1209 = vadd.f32 %v1207, %v1208
    %v1210 = vrcp.pop %v1209
    %v1211 = vmul.f32 %v1198, %v1210
    %v1212 = vmul.f32 %v1200, %v1210
    %1213 = vxpose.xlu0.b32.start [1/16] %v1103, 128
    %1214 = vxpose.xlu0.b32.cont [2/16] %v1104, 128
    %1215 = vxpose.xlu0.b32.cont [3/16] 0.0, 128
    %1216 = vxpose.xlu0.b32.cont [4/16] 0.0, 128
    %1217 = vxpose.xlu0.b32.cont [5/16] 0.0, 128
    %1218 = vxpose.xlu0.b32.cont [6/16] 0.0, 128
    %1219 = vxpose.xlu0.b32.cont [7/16] 0.0, 128
    %1220 = vxpose.xlu0.b32.cont [8/16] 0.0, 128
    %1221 = vxpose.xlu0.b32.cont [9/16] 0.0, 128
    %1222 = vxpose.xlu0.b32.cont [10/16] 0.0, 128
    %1223 = vxpose.xlu0.b32.cont [11/16] 0.0, 128
    %1224 = vxpose.xlu0.b32.cont [12/16] 0.0, 128
    %1225 = vxpose.xlu0.b32.cont [13/16] 0.0, 128
    %1226 = vxpose.xlu0.b32.cont [14/16] 0.0, 128
    %1227 = vxpose.xlu0.b32.cont [15/16] 0.0, 128
    %1228 = vxpose.xlu0.b32.end [16/16] 0.0, 128
    %v1229 = vpop.trf.xlu0
    %v1230 = vpop.trf.xlu0
    %v1231 = vpop.trf.xlu0
    %v1232 = vpop.trf.xlu0
    %v1233 = vpop.trf.xlu0
    %v1234 = vpop.trf.xlu0
    %v1235 = vpop.trf.xlu0
    %v1236 = vpop.trf.xlu0
    %v1237 = vpop.trf.xlu0
    %v1238 = vpop.trf.xlu0
    %v1239 = vpop.trf.xlu0
    %v1240 = vpop.trf.xlu0
    %v1241 = vpop.trf.xlu0
    %v1242 = vpop.trf.xlu0
    %v1243 = vpop.trf.xlu0
    %v1244 = vpop.trf.xlu0
    %v1246 = vsel %vm225, %v1229, 0
    %v1249 = vsel %vm225, %v1230, 0
    %v1252 = vsel %vm225, %v1231, 0
    %v1255 = vsel %vm225, %v1232, 0
    %v1258 = vsel %vm238, %v1212, 0
    %1260 = vmatprep.subr.mxu0 0.0
    %1261 = vmatpush1.msra.mxu0 %v1211
    %1262 = vmatprep.subr.mxu0 0.0
    %1263 = vmatpush1.msra.mxu0 %v1258
    %1264 = vmatprep.subr.mxu0 0.0
    %1265 = vmatpush1.msra.mxu0 0.0
    %1266 = vmatprep.subr.mxu0 0.0
    %1267 = vmatpush1.msra.mxu0 0.0
    %1268 = vmatprep.subr.mxu0 0.0
    %1269 = vmatpush1.msra.mxu0 0.0
    %1270 = vmatprep.subr.mxu0 0.0
    %1271 = vmatpush1.msra.mxu0 0.0
    %1272 = vmatprep.subr.mxu0 0.0
    %1273 = vmatpush1.msra.mxu0 0.0
    %1274 = vmatprep.subr.mxu0 0.0
    %1275 = vmatpush1.msra.mxu0 0.0
    %1276 = vmatprep.subr.mxu0 0.0
    %1277 = vmatpush1.msra.mxu0 0.0
    %1278 = vmatprep.subr.mxu0 0.0
    %1279 = vmatpush1.msra.mxu0 0.0
    %1280 = vmatprep.subr.mxu0 0.0
    %1281 = vmatpush1.msra.mxu0 0.0
    %1282 = vmatprep.subr.mxu0 0.0
    %1283 = vmatpush1.msra.mxu0 0.0
    %1284 = vmatprep.subr.mxu0 0.0
    %1285 = vmatpush1.msra.mxu0 0.0
    %1286 = vmatprep.subr.mxu0 0.0
    %1287 = vmatpush1.msra.mxu0 0.0
    %1288 = vmatprep.subr.mxu0 0.0
    %1289 = vmatpush1.msra.mxu0 0.0
    %1290 = vmatprep.subr.mxu0 0.0
    %1291 = vmatpush1.msra.mxu0 0.0
    %1292 = vmatprep.subr.mxu0 0.0
    %1293 = vmatpush1.msra.mxu0 0.0
    %1294 = vmatprep.subr.mxu0 0.0
    %1295 = vmatpush1.msra.mxu0 0.0
    %1296 = vmatprep.subr.mxu0 0.0
    %1297 = vmatpush1.msra.mxu0 0.0
    %1298 = vmatprep.subr.mxu0 0.0
    %1299 = vmatpush1.msra.mxu0 0.0
    %1300 = vmatprep.subr.mxu0 0.0
    %1301 = vmatpush1.msra.mxu0 0.0
    %1302 = vmatprep.subr.mxu0 0.0
    %1303 = vmatpush1.msra.mxu0 0.0
    %1304 = vmatprep.subr.mxu0 0.0
    %1305 = vmatpush1.msra.mxu0 0.0
    %1306 = vmatprep.subr.mxu0 0.0
    %1307 = vmatpush1.msra.mxu0 0.0
    %1308 = vmatprep.subr.mxu0 0.0
    %1309 = vmatpush1.msra.mxu0 0.0
    %1310 = vmatprep.subr.mxu0 0.0
    %1311 = vmatpush1.msra.mxu0 0.0
    %1312 = vmatprep.subr.mxu0 0.0
    %1313 = vmatpush1.msra.mxu0 0.0
    %1314 = vmatprep.subr.mxu0 0.0
    %1315 = vmatpush1.msra.mxu0 0.0
    %1316 = vmatprep.subr.mxu0 0.0
    %1317 = vmatpush1.msra.mxu0 0.0
    %1318 = vmatprep.subr.mxu0 0.0
    %1319 = vmatpush1.msra.mxu0 0.0
    %1320 = vmatprep.subr.mxu0 0.0
    %1321 = vmatpush1.msra.mxu0 0.0
    %1322 = vmatprep.subr.mxu0 0.0
    %1323 = vmatpush1.msra.mxu0 0.0
    %1324 = vmatprep.mubr.f32.mxu0 0.0
    %1325 = vmatmul.mubr.f32.gmra.mrb[0].mxu0 %v1246
    %v1326 = vpop.f32.mrb[0].mxu0
    %v1327 = vadd.f32 0.0, %v1326
    %v1328 = vpop.f32.mrb[0].mxu0
    %1329 = vmatprep.mubr.f32.mxu0 0.0
    %1330 = vmatmul.mubr.f32.gmra.mrb[0].mxu0 %v1249
    %v1331 = vpop.f32.mrb[0].mxu0
    %v1332 = vadd.f32 0.0, %v1331
    %v1333 = vpop.f32.mrb[0].mxu0
    %1334 = vmatprep.mubr.f32.mxu0 0.0
    %1335 = vmatmul.mubr.f32.gmra.mrb[0].mxu0 %v1252
    %v1336 = vpop.f32.mrb[0].mxu0
    %v1337 = vadd.f32 0.0, %v1336
    %v1338 = vpop.f32.mrb[0].mxu0
    %1339 = vmatprep.mubr.f32.mxu0 0.0
    %1340 = vmatmul.mubr.f32.gmra.mrb[0].mxu0 %v1255
    %v1341 = vpop.f32.mrb[0].mxu0
    %v1342 = vadd.f32 0.0, %v1341
    %v1343 = vpop.f32.mrb[0].mxu0
    %1344 = vdwg.mxu0
    %1345 = vmatprep.subr.mxu0 0.0
    %1346 = vmatpush1.msra.mxu0 %v1327
    %1347 = vmatprep.subr.mxu0 0.0
    %1348 = vmatpush1.msra.mxu0 %v1332
    %1349 = vmatprep.subr.mxu0 0.0
    %1350 = vmatpush1.msra.mxu0 %v1337
    %1351 = vmatprep.subr.mxu0 0.0
    %1352 = vmatpush1.msra.mxu0 %v1342
    %1353 = vmatprep.subr.mxu0 0.0
    %1354 = vmatpush1.msra.mxu0 0.0
    %1355 = vmatprep.subr.mxu0 0.0
    %1356 = vmatpush1.msra.mxu0 0.0
    %1357 = vmatprep.subr.mxu0 0.0
    %1358 = vmatpush1.msra.mxu0 0.0
    %1359 = vmatprep.subr.mxu0 0.0
    %1360 = vmatpush1.msra.mxu0 0.0
    %1361 = vmatprep.subr.mxu0 0.0
    %1362 = vmatpush1.msra.mxu0 0.0
    %1363 = vmatprep.subr.mxu0 0.0
    %1364 = vmatpush1.msra.mxu0 0.0
    %1365 = vmatprep.subr.mxu0 0.0
    %1366 = vmatpush1.msra.mxu0 0.0
    %1367 = vmatprep.subr.mxu0 0.0
    %1368 = vmatpush1.msra.mxu0 0.0
    %1369 = vmatprep.subr.mxu0 0.0
    %1370 = vmatpush1.msra.mxu0 0.0
    %1371 = vmatprep.subr.mxu0 0.0
    %1372 = vmatpush1.msra.mxu0 0.0
    %1373 = vmatprep.subr.mxu0 0.0
    %1374 = vmatpush1.msra.mxu0 0.0
    %1375 = vmatprep.subr.mxu0 0.0
    %1376 = vmatpush1.msra.mxu0 0.0
    %1377 = vmatprep.subr.mxu0 0.0
    %1378 = vmatpush1.msra.mxu0 0.0
    %1379 = vmatprep.subr.mxu0 0.0
    %1380 = vmatpush1.msra.mxu0 0.0
    %1381 = vmatprep.subr.mxu0 0.0
    %1382 = vmatpush1.msra.mxu0 0.0
    %1383 = vmatprep.subr.mxu0 0.0
    %1384 = vmatpush1.msra.mxu0 0.0
    %1385 = vmatprep.subr.mxu0 0.0
    %1386 = vmatpush1.msra.mxu0 0.0
    %1387 = vmatprep.subr.mxu0 0.0
    %1388 = vmatpush1.msra.mxu0 0.0
    %1389 = vmatprep.subr.mxu0 0.0
    %1390 = vmatpush1.msra.mxu0 0.0
    %1391 = vmatprep.subr.mxu0 0.0
    %1392 = vmatpush1.msra.mxu0 0.0
    %1393 = vmatprep.subr.mxu0 0.0
    %1394 = vmatpush1.msra.mxu0 0.0
    %1395 = vmatprep.subr.mxu0 0.0
    %1396 = vmatpush1.msra.mxu0 0.0
    %1397 = vmatprep.subr.mxu0 0.0
    %1398 = vmatpush1.msra.mxu0 0.0
    %1399 = vmatprep.subr.mxu0 0.0
    %1400 = vmatpush1.msra.mxu0 0.0
    %1401 = vmatprep.subr.mxu0 0.0
    %1402 = vmatpush1.msra.mxu0 0.0
    %1403 = vmatprep.subr.mxu0 0.0
    %1404 = vmatpush1.msra.mxu0 0.0
    %1405 = vmatprep.subr.mxu0 0.0
    %1406 = vmatpush1.msra.mxu0 0.0
    %1407 = vmatprep.subr.mxu0 0.0
    %1408 = vmatpush1.msra.mxu0 0.0
    %1409 = vmatprep.mubr.f32.mxu0 0.0
    %1410 = vmatmul.mubr.f32.gmra.mrb[0].mxu0 %v328
    %v1411 = vpop.f32.mrb[0].mxu0
    %v1412 = vadd.f32 0.0, %v1411
    %v1413 = vpop.f32.mrb[0].mxu0
    %1414 = vdwg.mxu0
    %v1415 = vld [vmem:[%s3] sm:$0xff]
    %v1416 = vld [vmem:[%s3 + $0x8] sm:$0xff]
    %v1417 = vld [vmem:[%s3 + $0x10] sm:$0xff]
    %v1418 = vld [vmem:[%s3 + $0x18] sm:$0xff]
    %1419 = vmatprep.subr.mxu0 0.0
    %1420 = vmatpush1.msra.mxu0 %v1327
    %1421 = vmatprep.subr.mxu0 0.0
    %1422 = vmatpush1.msra.mxu0 %v1332
    %1423 = vmatprep.subr.mxu0 0.0
    %1424 = vmatpush1.msra.mxu0 %v1337
    %1425 = vmatprep.subr.mxu0 0.0
    %1426 = vmatpush1.msra.mxu0 %v1342
    %1427 = vmatprep.subr.mxu0 0.0
    %1428 = vmatpush1.msra.mxu0 0.0
    %1429 = vmatprep.subr.mxu0 0.0
    %1430 = vmatpush1.msra.mxu0 0.0
    %1431 = vmatprep.subr.mxu0 0.0
    %1432 = vmatpush1.msra.mxu0 0.0
    %1433 = vmatprep.subr.mxu0 0.0
    %1434 = vmatpush1.msra.mxu0 0.0
    %1435 = vmatprep.subr.mxu0 0.0
    %1436 = vmatpush1.msra.mxu0 0.0
    %1437 = vmatprep.subr.mxu0 0.0
    %1438 = vmatpush1.msra.mxu0 0.0
    %1439 = vmatprep.subr.mxu0 0.0
    %1440 = vmatpush1.msra.mxu0 0.0
    %1441 = vmatprep.subr.mxu0 0.0
    %1442 = vmatpush1.msra.mxu0 0.0
    %1443 = vmatprep.subr.mxu0 0.0
    %1444 = vmatpush1.msra.mxu0 0.0
    %1445 = vmatprep.subr.mxu0 0.0
    %1446 = vmatpush1.msra.mxu0 0.0
    %1447 = vmatprep.subr.mxu0 0.0
    %1448 = vmatpush1.msra.mxu0 0.0
    %1449 = vmatprep.subr.mxu0 0.0
    %1450 = vmatpush1.msra.mxu0 0.0
    %1451 = vmatprep.subr.mxu0 0.0
    %1452 = vmatpush1.msra.mxu0 0.0
    %1453 = vmatprep.subr.mxu0 0.0
    %1454 = vmatpush1.msra.mxu0 0.0
    %1455 = vmatprep.subr.mxu0 0.0
    %1456 = vmatpush1.msra.mxu0 0.0
    %1457 = vmatprep.subr.mxu0 0.0
    %1458 = vmatpush1.msra.mxu0 0.0
    %1459 = vmatprep.subr.mxu0 0.0
    %1460 = vmatpush1.msra.mxu0 0.0
    %1461 = vmatprep.subr.mxu0 0.0
    %1462 = vmatpush1.msra.mxu0 0.0
    %1463 = vmatprep.subr.mxu0 0.0
    %1464 = vmatpush1.msra.mxu0 0.0
    %1465 = vmatprep.subr.mxu0 0.0
    %1466 = vmatpush1.msra.mxu0 0.0
    %1467 = vmatprep.subr.mxu0 0.0
    %1468 = vmatpush1.msra.mxu0 0.0
    %1469 = vmatprep.subr.mxu0 0.0
    %1470 = vmatpush1.msra.mxu0 0.0
    %1471 = vmatprep.subr.mxu0 0.0
    %1472 = vmatpush1.msra.mxu0 0.0
    %1473 = vmatprep.subr.mxu0 0.0
    %1474 = vmatpush1.msra.mxu0 0.0
    %1475 = vmatprep.subr.mxu0 0.0
    %1476 = vmatpush1.msra.mxu0 0.0
    %1477 = vmatprep.subr.mxu0 0.0
    %1478 = vmatpush1.msra.mxu0 0.0
    %1479 = vmatprep.subr.mxu0 0.0
    %1480 = vmatpush1.msra.mxu0 0.0
    %1481 = vmatprep.subr.mxu0 0.0
    %1482 = vmatpush1.msra.mxu0 0.0
    %1483 = vmatprep.mubr.f32.mxu0 0.0
    %1484 = vmatmul.mubr.f32.gmra.mrb[0].mxu0 %v405
    %v1485 = vpop.f32.mrb[0].mxu0
    %v1486 = vadd.f32 0.0, %v1485
    %v1487 = vpop.f32.mrb[0].mxu0
    %1488 = vdwg.mxu0
    %v1489 = vld [vmem:[%s477] sm:$0xff]
    %v1490 = vld [vmem:[%s477 + $0x8] sm:$0xff]
    %v1491 = vld [vmem:[%s477 + $0x10] sm:$0xff]
    %v1492 = vld [vmem:[%s477 + $0x18] sm:$0xff]
    %v1494 = vsel %vm164, %v1486, 0
    %v1497 = vsel %vm164, %v1489, 0
    %v1500 = vsel %vm164, %v1490, 0
    %v1503 = vsel %vm164, %v1491, 0
    %v1506 = vsel %vm164, %v1492, 0
    %1508 = vmatprep.subr.mxu0 0.0
    %1509 = vmatpush1.xpose.msra.mxu0 %v1497
    %1510 = vmatprep.subr.mxu0 0.0
    %1511 = vmatpush1.xpose.msra.mxu0 %v1500
    %1512 = vmatprep.subr.mxu0 0.0
    %1513 = vmatpush1.xpose.msra.mxu0 %v1503
    %1514 = vmatprep.subr.mxu0 0.0
    %1515 = vmatpush1.xpose.msra.mxu0 %v1506
    %1516 = vmatprep.subr.mxu0 0.0
    %1517 = vmatpush1.xpose.msra.mxu0 0.0
    %1518 = vmatprep.subr.mxu0 0.0
    %1519 = vmatpush1.xpose.msra.mxu0 0.0
    %1520 = vmatprep.subr.mxu0 0.0
    %1521 = vmatpush1.xpose.msra.mxu0 0.0
    %1522 = vmatprep.subr.mxu0 0.0
    %1523 = vmatpush1.xpose.msra.mxu0 0.0
    %1524 = vmatprep.subr.mxu0 0.0
    %1525 = vmatpush1.xpose.msra.mxu0 0.0
    %1526 = vmatprep.subr.mxu0 0.0
    %1527 = vmatpush1.xpose.msra.mxu0 0.0
    %1528 = vmatprep.subr.mxu0 0.0
    %1529 = vmatpush1.xpose.msra.mxu0 0.0
    %1530 = vmatprep.subr.mxu0 0.0
    %1531 = vmatpush1.xpose.msra.mxu0 0.0
    %1532 = vmatprep.subr.mxu0 0.0
    %1533 = vmatpush1.xpose.msra.mxu0 0.0
    %1534 = vmatprep.subr.mxu0 0.0
    %1535 = vmatpush1.xpose.msra.mxu0 0.0
    %1536 = vmatprep.subr.mxu0 0.0
    %1537 = vmatpush1.xpose.msra.mxu0 0.0
    %1538 = vmatprep.subr.mxu0 0.0
    %1539 = vmatpush1.xpose.msra.mxu0 0.0
    %1540 = vmatprep.subr.mxu0 0.0
    %1541 = vmatpush1.xpose.msra.mxu0 0.0
    %1542 = vmatprep.subr.mxu0 0.0
    %1543 = vmatpush1.xpose.msra.mxu0 0.0
    %1544 = vmatprep.subr.mxu0 0.0
    %1545 = vmatpush1.xpose.msra.mxu0 0.0
    %1546 = vmatprep.subr.mxu0 0.0
    %1547 = vmatpush1.xpose.msra.mxu0 0.0
    %1548 = vmatprep.subr.mxu0 0.0
    %1549 = vmatpush1.xpose.msra.mxu0 0.0
    %1550 = vmatprep.subr.mxu0 0.0
    %1551 = vmatpush1.xpose.msra.mxu0 0.0
    %1552 = vmatprep.subr.mxu0 0.0
    %1553 = vmatpush1.xpose.msra.mxu0 0.0
    %1554 = vmatprep.subr.mxu0 0.0
    %1555 = vmatpush1.xpose.msra.mxu0 0.0
    %1556 = vmatprep.subr.mxu0 0.0
    %1557 = vmatpush1.xpose.msra.mxu0 0.0
    %1558 = vmatprep.subr.mxu0 0.0
    %1559 = vmatpush1.xpose.msra.mxu0 0.0
    %1560 = vmatprep.subr.mxu0 0.0
    %1561 = vmatpush1.xpose.msra.mxu0 0.0
    %1562 = vmatprep.subr.mxu0 0.0
    %1563 = vmatpush1.xpose.msra.mxu0 0.0
    %1564 = vmatprep.subr.mxu0 0.0
    %1565 = vmatpush1.xpose.msra.mxu0 0.0
    %1566 = vmatprep.subr.mxu0 0.0
    %1567 = vmatpush1.xpose.msra.mxu0 0.0
    %1568 = vmatprep.subr.mxu0 0.0
    %1569 = vmatpush1.xpose.msra.mxu0 0.0
    %1570 = vmatprep.subr.mxu0 0.0
    %1571 = vmatpush1.xpose.msra.mxu0 0.0
    %1572 = vmatprep.mubr.f32.mxu0 0.0
    %1573 = vmatmul.mubr.f32.gmra.mrb[0].mxu0 %v1494
    %v1574 = vpop.f32.mrb[0].mxu0
    %v1575 = vadd.f32 0.0, %v1574
    %v1576 = vpop.f32.mrb[0].mxu0
    %1577 = vdwg.mxu0
    %v1579 = vsel %vm164, %v1412, 0
    %v1582 = vsel %vm164, %v1415, 0
    %v1585 = vsel %vm164, %v1416, 0
    %v1588 = vsel %vm164, %v1417, 0
    %v1591 = vsel %vm164, %v1418, 0
    %1593 = vmatprep.subr.mxu0 0.0
    %1594 = vmatpush1.xpose.msra.mxu0 %v1582
    %1595 = vmatprep.subr.mxu0 0.0
    %1596 = vmatpush1.xpose.msra.mxu0 %v1585
    %1597 = vmatprep.subr.mxu0 0.0
    %1598 = vmatpush1.xpose.msra.mxu0 %v1588
    %1599 = vmatprep.subr.mxu0 0.0
    %1600 = vmatpush1.xpose.msra.mxu0 %v1591
    %1601 = vmatprep.subr.mxu0 0.0
    %1602 = vmatpush1.xpose.msra.mxu0 0.0
    %1603 = vmatprep.subr.mxu0 0.0
    %1604 = vmatpush1.xpose.msra.mxu0 0.0
    %1605 = vmatprep.subr.mxu0 0.0
    %1606 = vmatpush1.xpose.msra.mxu0 0.0
    %1607 = vmatprep.subr.mxu0 0.0
    %1608 = vmatpush1.xpose.msra.mxu0 0.0
    %1609 = vmatprep.subr.mxu0 0.0
    %1610 = vmatpush1.xpose.msra.mxu0 0.0
    %1611 = vmatprep.subr.mxu0 0.0
    %1612 = vmatpush1.xpose.msra.mxu0 0.0
    %1613 = vmatprep.subr.mxu0 0.0
    %1614 = vmatpush1.xpose.msra.mxu0 0.0
    %1615 = vmatprep.subr.mxu0 0.0
    %1616 = vmatpush1.xpose.msra.mxu0 0.0
    %1617 = vmatprep.subr.mxu0 0.0
    %1618 = vmatpush1.xpose.msra.mxu0 0.0
    %1619 = vmatprep.subr.mxu0 0.0
    %1620 = vmatpush1.xpose.msra.mxu0 0.0
    %1621 = vmatprep.subr.mxu0 0.0
    %1622 = vmatpush1.xpose.msra.mxu0 0.0
    %1623 = vmatprep.subr.mxu0 0.0
    %1624 = vmatpush1.xpose.msra.mxu0 0.0
    %1625 = vmatprep.subr.mxu0 0.0
    %1626 = vmatpush1.xpose.msra.mxu0 0.0
    %1627 = vmatprep.subr.mxu0 0.0
    %1628 = vmatpush1.xpose.msra.mxu0 0.0
    %1629 = vmatprep.subr.mxu0 0.0
    %1630 = vmatpush1.xpose.msra.mxu0 0.0
    %1631 = vmatprep.subr.mxu0 0.0
    %1632 = vmatpush1.xpose.msra.mxu0 0.0
    %1633 = vmatprep.subr.mxu0 0.0
    %1634 = vmatpush1.xpose.msra.mxu0 0.0
    %1635 = vmatprep.subr.mxu0 0.0
    %1636 = vmatpush1.xpose.msra.mxu0 0.0
    %1637 = vmatprep.subr.mxu0 0.0
    %1638 = vmatpush1.xpose.msra.mxu0 0.0
    %1639 = vmatprep.subr.mxu0 0.0
    %1640 = vmatpush1.xpose.msra.mxu0 0.0
    %1641 = vmatprep.subr.mxu0 0.0
    %1642 = vmatpush1.xpose.msra.mxu0 0.0
    %1643 = vmatprep.subr.mxu0 0.0
    %1644 = vmatpush1.xpose.msra.mxu0 0.0
    %1645 = vmatprep.subr.mxu0 0.0
    %1646 = vmatpush1.xpose.msra.mxu0 0.0
    %1647 = vmatprep.subr.mxu0 0.0
    %1648 = vmatpush1.xpose.msra.mxu0 0.0
    %1649 = vmatprep.subr.mxu0 0.0
    %1650 = vmatpush1.xpose.msra.mxu0 0.0
    %1651 = vmatprep.subr.mxu0 0.0
    %1652 = vmatpush1.xpose.msra.mxu0 0.0
    %1653 = vmatprep.subr.mxu0 0.0
    %1654 = vmatpush1.xpose.msra.mxu0 0.0
    %1655 = vmatprep.subr.mxu0 0.0
    %1656 = vmatpush1.xpose.msra.mxu0 0.0
    %1657 = vmatprep.mubr.f32.mxu0 0.0
    %1658 = vmatmul.mubr.f32.gmra.mrb[0].mxu0 %v1579
    %v1659 = vpop.f32.mrb[0].mxu0
    %v1660 = vadd.f32 %v1575, %v1659
    %v1661 = vpop.f32.mrb[0].mxu0
    %1662 = vdwg.mxu0
    %1663 = vmatprep.subr.mxu0 0.0
    %1664 = vmatpush1.msra.mxu0 %v1327
    %1665 = vmatprep.subr.mxu0 0.0
    %1666 = vmatpush1.msra.mxu0 %v1332
    %1667 = vmatprep.subr.mxu0 0.0
    %1668 = vmatpush1.msra.mxu0 %v1337
    %1669 = vmatprep.subr.mxu0 0.0
    %1670 = vmatpush1.msra.mxu0 %v1342
    %1671 = vmatprep.subr.mxu0 0.0
    %1672 = vmatpush1.msra.mxu0 0.0
    %1673 = vmatprep.subr.mxu0 0.0
    %1674 = vmatpush1.msra.mxu0 0.0
    %1675 = vmatprep.subr.mxu0 0.0
    %1676 = vmatpush1.msra.mxu0 0.0
    %1677 = vmatprep.subr.mxu0 0.0
    %1678 = vmatpush1.msra.mxu0 0.0
    %1679 = vmatprep.subr.mxu0 0.0
    %1680 = vmatpush1.msra.mxu0 0.0
    %1681 = vmatprep.subr.mxu0 0.0
    %1682 = vmatpush1.msra.mxu0 0.0
    %1683 = vmatprep.subr.mxu0 0.0
    %1684 = vmatpush1.msra.mxu0 0.0
    %1685 = vmatprep.subr.mxu0 0.0
    %1686 = vmatpush1.msra.mxu0 0.0
    %1687 = vmatprep.subr.mxu0 0.0
    %1688 = vmatpush1.msra.mxu0 0.0
    %1689 = vmatprep.subr.mxu0 0.0
    %1690 = vmatpush1.msra.mxu0 0.0
    %1691 = vmatprep.subr.mxu0 0.0
    %1692 = vmatpush1.msra.mxu0 0.0
    %1693 = vmatprep.subr.mxu0 0.0
    %1694 = vmatpush1.msra.mxu0 0.0
    %1695 = vmatprep.subr.mxu0 0.0
    %1696 = vmatpush1.msra.mxu0 0.0
    %1697 = vmatprep.subr.mxu0 0.0
    %1698 = vmatpush1.msra.mxu0 0.0
    %1699 = vmatprep.subr.mxu0 0.0
    %1700 = vmatpush1.msra.mxu0 0.0
    %1701 = vmatprep.subr.mxu0 0.0
    %1702 = vmatpush1.msra.mxu0 0.0
    %1703 = vmatprep.subr.mxu0 0.0
    %1704 = vmatpush1.msra.mxu0 0.0
    %1705 = vmatprep.subr.mxu0 0.0
    %1706 = vmatpush1.msra.mxu0 0.0
    %1707 = vmatprep.subr.mxu0 0.0
    %1708 = vmatpush1.msra.mxu0 0.0
    %1709 = vmatprep.subr.mxu0 0.0
    %1710 = vmatpush1.msra.mxu0 0.0
    %1711 = vmatprep.subr.mxu0 0.0
    %1712 = vmatpush1.msra.mxu0 0.0
    %1713 = vmatprep.subr.mxu0 0.0
    %1714 = vmatpush1.msra.mxu0 0.0
    %1715 = vmatprep.subr.mxu0 0.0
    %1716 = vmatpush1.msra.mxu0 0.0
    %1717 = vmatprep.subr.mxu0 0.0
    %1718 = vmatpush1.msra.mxu0 0.0
    %1719 = vmatprep.subr.mxu0 0.0
    %1720 = vmatpush1.msra.mxu0 0.0
    %1721 = vmatprep.subr.mxu0 0.0
    %1722 = vmatpush1.msra.mxu0 0.0
    %1723 = vmatprep.subr.mxu0 0.0
    %1724 = vmatpush1.msra.mxu0 0.0
    %1725 = vmatprep.subr.mxu0 0.0
    %1726 = vmatpush1.msra.mxu0 0.0
    %1727 = vmatprep.mubr.f32.mxu0 0.0
    %1728 = vmatmul.mubr.f32.gmra.mrb[0].mxu0 %v653
    %v1729 = vpop.f32.mrb[0].mxu0
    %v1730 = vadd.f32 0.0, %v1729
    %v1731 = vpop.f32.mrb[0].mxu0
    %1732 = vdwg.mxu0
    %v1733 = vld [vmem:[%s725] sm:$0xff]
    %v1734 = vld [vmem:[%s725 + $0x8] sm:$0xff]
    %v1735 = vld [vmem:[%s725 + $0x10] sm:$0xff]
    %v1736 = vld [vmem:[%s725 + $0x18] sm:$0xff]
    %v1738 = vsel %vm164, %v1730, 0
    %v1741 = vsel %vm164, %v1733, 0
    %v1744 = vsel %vm164, %v1734, 0
    %v1747 = vsel %vm164, %v1735, 0
    %v1750 = vsel %vm164, %v1736, 0
    %1752 = vmatprep.subr.mxu0 0.0
    %1753 = vmatpush1.xpose.msra.mxu0 %v1741
    %1754 = vmatprep.subr.mxu0 0.0
    %1755 = vmatpush1.xpose.msra.mxu0 %v1744
    %1756 = vmatprep.subr.mxu0 0.0
    %1757 = vmatpush1.xpose.msra.mxu0 %v1747
    %1758 = vmatprep.subr.mxu0 0.0
    %1759 = vmatpush1.xpose.msra.mxu0 %v1750
    %1760 = vmatprep.subr.mxu0 0.0
    %1761 = vmatpush1.xpose.msra.mxu0 0.0
    %1762 = vmatprep.subr.mxu0 0.0
    %1763 = vmatpush1.xpose.msra.mxu0 0.0
    %1764 = vmatprep.subr.mxu0 0.0
    %1765 = vmatpush1.xpose.msra.mxu0 0.0
    %1766 = vmatprep.subr.mxu0 0.0
    %1767 = vmatpush1.xpose.msra.mxu0 0.0
    %1768 = vmatprep.subr.mxu0 0.0
    %1769 = vmatpush1.xpose.msra.mxu0 0.0
    %1770 = vmatprep.subr.mxu0 0.0
    %1771 = vmatpush1.xpose.msra.mxu0 0.0
    %1772 = vmatprep.subr.mxu0 0.0
    %1773 = vmatpush1.xpose.msra.mxu0 0.0
    %1774 = vmatprep.subr.mxu0 0.0
    %1775 = vmatpush1.xpose.msra.mxu0 0.0
    %1776 = vmatprep.subr.mxu0 0.0
    %1777 = vmatpush1.xpose.msra.mxu0 0.0
    %1778 = vmatprep.subr.mxu0 0.0
    %1779 = vmatpush1.xpose.msra.mxu0 0.0
    %1780 = vmatprep.subr.mxu0 0.0
    %1781 = vmatpush1.xpose.msra.mxu0 0.0
    %1782 = vmatprep.subr.mxu0 0.0
    %1783 = vmatpush1.xpose.msra.mxu0 0.0
    %1784 = vmatprep.subr.mxu0 0.0
    %1785 = vmatpush1.xpose.msra.mxu0 0.0
    %1786 = vmatprep.subr.mxu0 0.0
    %1787 = vmatpush1.xpose.msra.mxu0 0.0
    %1788 = vmatprep.subr.mxu0 0.0
    %1789 = vmatpush1.xpose.msra.mxu0 0.0
    %1790 = vmatprep.subr.mxu0 0.0
    %1791 = vmatpush1.xpose.msra.mxu0 0.0
    %1792 = vmatprep.subr.mxu0 0.0
    %1793 = vmatpush1.xpose.msra.mxu0 0.0
    %1794 = vmatprep.subr.mxu0 0.0
    %1795 = vmatpush1.xpose.msra.mxu0 0.0
    %1796 = vmatprep.subr.mxu0 0.0
    %1797 = vmatpush1.xpose.msra.mxu0 0.0
    %1798 = vmatprep.subr.mxu0 0.0
    %1799 = vmatpush1.xpose.msra.mxu0 0.0
    %1800 = vmatprep.subr.mxu0 0.0
    %1801 = vmatpush1.xpose.msra.mxu0 0.0
    %1802 = vmatprep.subr.mxu0 0.0
    %1803 = vmatpush1.xpose.msra.mxu0 0.0
    %1804 = vmatprep.subr.mxu0 0.0
    %1805 = vmatpush1.xpose.msra.mxu0 0.0
    %1806 = vmatprep.subr.mxu0 0.0
    %1807 = vmatpush1.xpose.msra.mxu0 0.0
    %1808 = vmatprep.subr.mxu0 0.0
    %1809 = vmatpush1.xpose.msra.mxu0 0.0
    %1810 = vmatprep.subr.mxu0 0.0
    %1811 = vmatpush1.xpose.msra.mxu0 0.0
    %1812 = vmatprep.subr.mxu0 0.0
    %1813 = vmatpush1.xpose.msra.mxu0 0.0
    %1814 = vmatprep.subr.mxu0 0.0
    %1815 = vmatpush1.xpose.msra.mxu0 0.0
    %1816 = vmatprep.mubr.f32.mxu0 0.0
    %1817 = vmatmul.mubr.f32.gmra.mrb[0].mxu0 %v1738
    %v1818 = vpop.f32.mrb[0].mxu0
    %v1819 = vadd.f32 0.0, %v1818
    %v1820 = vpop.f32.mrb[0].mxu0
    %1821 = vdwg.mxu0
    %v1822 = vadd.f32 %v1660, %v1819
    %1823 = vmatprep.subr.mxu0 0.0
    %1824 = vmatpush1.msra.mxu0 %v1327
    %1825 = vmatprep.subr.mxu0 0.0
    %1826 = vmatpush1.msra.mxu0 %v1332
    %1827 = vmatprep.subr.mxu0 0.0
    %1828 = vmatpush1.msra.mxu0 %v1337
    %1829 = vmatprep.subr.mxu0 0.0
    %1830 = vmatpush1.msra.mxu0 %v1342
    %1831 = vmatprep.subr.mxu0 0.0
    %1832 = vmatpush1.msra.mxu0 0.0
    %1833 = vmatprep.subr.mxu0 0.0
    %1834 = vmatpush1.msra.mxu0 0.0
    %1835 = vmatprep.subr.mxu0 0.0
    %1836 = vmatpush1.msra.mxu0 0.0
    %1837 = vmatprep.subr.mxu0 0.0
    %1838 = vmatpush1.msra.mxu0 0.0
    %1839 = vmatprep.subr.mxu0 0.0
    %1840 = vmatpush1.msra.mxu0 0.0
    %1841 = vmatprep.subr.mxu0 0.0
    %1842 = vmatpush1.msra.mxu0 0.0
    %1843 = vmatprep.subr.mxu0 0.0
    %1844 = vmatpush1.msra.mxu0 0.0
    %1845 = vmatprep.subr.mxu0 0.0
    %1846 = vmatpush1.msra.mxu0 0.0
    %1847 = vmatprep.subr.mxu0 0.0
    %1848 = vmatpush1.msra.mxu0 0.0
    %1849 = vmatprep.subr.mxu0 0.0
    %1850 = vmatpush1.msra.mxu0 0.0
    %1851 = vmatprep.subr.mxu0 0.0
    %1852 = vmatpush1.msra.mxu0 0.0
    %1853 = vmatprep.subr.mxu0 0.0
    %1854 = vmatpush1.msra.mxu0 0.0
    %1855 = vmatprep.subr.mxu0 0.0
    %1856 = vmatpush1.msra.mxu0 0.0
    %1857 = vmatprep.subr.mxu0 0.0
    %1858 = vmatpush1.msra.mxu0 0.0
    %1859 = vmatprep.subr.mxu0 0.0
    %1860 = vmatpush1.msra.mxu0 0.0
    %1861 = vmatprep.subr.mxu0 0.0
    %1862 = vmatpush1.msra.mxu0 0.0
    %1863 = vmatprep.subr.mxu0 0.0
    %1864 = vmatpush1.msra.mxu0 0.0
    %1865 = vmatprep.subr.mxu0 0.0
    %1866 = vmatpush1.msra.mxu0 0.0
    %1867 = vmatprep.subr.mxu0 0.0
    %1868 = vmatpush1.msra.mxu0 0.0
    %1869 = vmatprep.subr.mxu0 0.0
    %1870 = vmatpush1.msra.mxu0 0.0
    %1871 = vmatprep.subr.mxu0 0.0
    %1872 = vmatpush1.msra.mxu0 0.0
    %1873 = vmatprep.subr.mxu0 0.0
    %1874 = vmatpush1.msra.mxu0 0.0
    %1875 = vmatprep.subr.mxu0 0.0
    %1876 = vmatpush1.msra.mxu0 0.0
    %1877 = vmatprep.subr.mxu0 0.0
    %1878 = vmatpush1.msra.mxu0 0.0
    %1879 = vmatprep.subr.mxu0 0.0
    %1880 = vmatpush1.msra.mxu0 0.0
    %1881 = vmatprep.subr.mxu0 0.0
    %1882 = vmatpush1.msra.mxu0 0.0
    %1883 = vmatprep.subr.mxu0 0.0
    %1884 = vmatpush1.msra.mxu0 0.0
    %1885 = vmatprep.subr.mxu0 0.0
    %1886 = vmatpush1.msra.mxu0 0.0
    %1887 = vmatprep.mubr.f32.mxu0 0.0
    %1888 = vmatmul.mubr.f32.gmra.mrb[0].mxu0 %v817
    %v1889 = vpop.f32.mrb[0].mxu0
    %v1890 = vadd.f32 0.0, %v1889
    %v1891 = vpop.f32.mrb[0].mxu0
    %1892 = vdwg.mxu0
    %v1893 = vld [vmem:[%s889] sm:$0xff]
    %v1894 = vld [vmem:[%s889 + $0x8] sm:$0xff]
    %v1895 = vld [vmem:[%s889 + $0x10] sm:$0xff]
    %v1896 = vld [vmem:[%s889 + $0x18] sm:$0xff]
    %v1898 = vsel %vm164, %v1890, 0
    %v1901 = vsel %vm164, %v1893, 0
    %v1904 = vsel %vm164, %v1894, 0
    %v1907 = vsel %vm164, %v1895, 0
    %v1910 = vsel %vm164, %v1896, 0
    %1912 = vmatprep.subr.mxu0 0.0
    %1913 = vmatpush1.xpose.msra.mxu0 %v1901
    %1914 = vmatprep.subr.mxu0 0.0
    %1915 = vmatpush1.xpose.msra.mxu0 %v1904
    %1916 = vmatprep.subr.mxu0 0.0
    %1917 = vmatpush1.xpose.msra.mxu0 %v1907
    %1918 = vmatprep.subr.mxu0 0.0
    %1919 = vmatpush1.xpose.msra.mxu0 %v1910
    %1920 = vmatprep.subr.mxu0 0.0
    %1921 = vmatpush1.xpose.msra.mxu0 0.0
    %1922 = vmatprep.subr.mxu0 0.0
    %1923 = vmatpush1.xpose.msra.mxu0 0.0
    %1924 = vmatprep.subr.mxu0 0.0
    %1925 = vmatpush1.xpose.msra.mxu0 0.0
    %1926 = vmatprep.subr.mxu0 0.0
    %1927 = vmatpush1.xpose.msra.mxu0 0.0
    %1928 = vmatprep.subr.mxu0 0.0
    %1929 = vmatpush1.xpose.msra.mxu0 0.0
    %1930 = vmatprep.subr.mxu0 0.0
    %1931 = vmatpush1.xpose.msra.mxu0 0.0
    %1932 = vmatprep.subr.mxu0 0.0
    %1933 = vmatpush1.xpose.msra.mxu0 0.0
    %1934 = vmatprep.subr.mxu0 0.0
    %1935 = vmatpush1.xpose.msra.mxu0 0.0
    %1936 = vmatprep.subr.mxu0 0.0
    %1937 = vmatpush1.xpose.msra.mxu0 0.0
    %1938 = vmatprep.subr.mxu0 0.0
    %1939 = vmatpush1.xpose.msra.mxu0 0.0
    %1940 = vmatprep.subr.mxu0 0.0
    %1941 = vmatpush1.xpose.msra.mxu0 0.0
    %1942 = vmatprep.subr.mxu0 0.0
    %1943 = vmatpush1.xpose.msra.mxu0 0.0
    %1944 = vmatprep.subr.mxu0 0.0
    %1945 = vmatpush1.xpose.msra.mxu0 0.0
    %1946 = vmatprep.subr.mxu0 0.0
    %1947 = vmatpush1.xpose.msra.mxu0 0.0
    %1948 = vmatprep.subr.mxu0 0.0
    %1949 = vmatpush1.xpose.msra.mxu0 0.0
    %1950 = vmatprep.subr.mxu0 0.0
    %1951 = vmatpush1.xpose.msra.mxu0 0.0
    %1952 = vmatprep.subr.mxu0 0.0
    %1953 = vmatpush1.xpose.msra.mxu0 0.0
    %1954 = vmatprep.subr.mxu0 0.0
    %1955 = vmatpush1.xpose.msra.mxu0 0.0
    %1956 = vmatprep.subr.mxu0 0.0
    %1957 = vmatpush1.xpose.msra.mxu0 0.0
    %1958 = vmatprep.subr.mxu0 0.0
    %1959 = vmatpush1.xpose.msra.mxu0 0.0
    %1960 = vmatprep.subr.mxu0 0.0
    %1961 = vmatpush1.xpose.msra.mxu0 0.0
    %1962 = vmatprep.subr.mxu0 0.0
    %1963 = vmatpush1.xpose.msra.mxu0 0.0
    %1964 = vmatprep.subr.mxu0 0.0
    %1965 = vmatpush1.xpose.msra.mxu0 0.0
    %1966 = vmatprep.subr.mxu0 0.0
    %1967 = vmatpush1.xpose.msra.mxu0 0.0
    %1968 = vmatprep.subr.mxu0 0.0
    %1969 = vmatpush1.xpose.msra.mxu0 0.0
    %1970 = vmatprep.subr.mxu0 0.0
    %1971 = vmatpush1.xpose.msra.mxu0 0.0
    %1972 = vmatprep.subr.mxu0 0.0
    %1973 = vmatpush1.xpose.msra.mxu0 0.0
    %1974 = vmatprep.subr.mxu0 0.0
    %1975 = vmatpush1.xpose.msra.mxu0 0.0
    %1976 = vmatprep.mubr.f32.mxu0 0.0
    %1977 = vmatmul.mubr.f32.gmra.mrb[0].mxu0 %v1898
    %v1978 = vpop.f32.mrb[0].mxu0
    %v1979 = vadd.f32 0.0, %v1978
    %v1980 = vpop.f32.mrb[0].mxu0
    %1981 = vdwg.mxu0
    %v1982 = vadd.f32 %v1822, %v1979
    %v1983 = vadd.f32 %v1982, %v984
    %v1984 = vmax.f32 %v1983, 0.0
    %v1986 = vsel %vm79, %v1984, 0
    %1988 = vmatprep.subr.mxu0 0.0
    %1989 = vmatpush1.xpose.msra.mxu0 %v1986
    %1990 = vmatprep.subr.mxu0 0.0
    %1991 = vmatpush1.xpose.msra.mxu0 0.0
    %1992 = vmatprep.subr.mxu0 0.0
    %1993 = vmatpush1.xpose.msra.mxu0 0.0
    %1994 = vmatprep.subr.mxu0 0.0
    %1995 = vmatpush1.xpose.msra.mxu0 0.0
    %1996 = vmatprep.subr.mxu0 0.0
    %1997 = vmatpush1.xpose.msra.mxu0 0.0
    %1998 = vmatprep.subr.mxu0 0.0
    %1999 = vmatpush1.xpose.msra.mxu0 0.0
    %2000 = vmatprep.subr.mxu0 0.0
    %2001 = vmatpush1.xpose.msra.mxu0 0.0
    %2002 = vmatprep.subr.mxu0 0.0
    %2003 = vmatpush1.xpose.msra.mxu0 0.0
    %2004 = vmatprep.subr.mxu0 0.0
    %2005 = vmatpush1.xpose.msra.mxu0 0.0
    %2006 = vmatprep.subr.mxu0 0.0
    %2007 = vmatpush1.xpose.msra.mxu0 0.0
    %2008 = vmatprep.subr.mxu0 0.0
    %2009 = vmatpush1.xpose.msra.mxu0 0.0
    %2010 = vmatprep.subr.mxu0 0.0
    %2011 = vmatpush1.xpose.msra.mxu0 0.0
    %2012 = vmatprep.subr.mxu0 0.0
    %2013 = vmatpush1.xpose.msra.mxu0 0.0
    %2014 = vmatprep.subr.mxu0 0.0
    %2015 = vmatpush1.xpose.msra.mxu0 0.0
    %2016 = vmatprep.subr.mxu0 0.0
    %2017 = vmatpush1.xpose.msra.mxu0 0.0
    %2018 = vmatprep.subr.mxu0 0.0
    %2019 = vmatpush1.xpose.msra.mxu0 0.0
    %2020 = vmatprep.subr.mxu0 0.0
    %2021 = vmatpush1.xpose.msra.mxu0 0.0
    %2022 = vmatprep.subr.mxu0 0.0
    %2023 = vmatpush1.xpose.msra.mxu0 0.0
    %2024 = vmatprep.subr.mxu0 0.0
    %2025 = vmatpush1.xpose.msra.mxu0 0.0
    %2026 = vmatprep.subr.mxu0 0.0
    %2027 = vmatpush1.xpose.msra.mxu0 0.0
    %2028 = vmatprep.subr.mxu0 0.0
    %2029 = vmatpush1.xpose.msra.mxu0 0.0
    %2030 = vmatprep.subr.mxu0 0.0
    %2031 = vmatpush1.xpose.msra.mxu0 0.0
    %2032 = vmatprep.subr.mxu0 0.0
    %2033 = vmatpush1.xpose.msra.mxu0 0.0
    %2034 = vmatprep.subr.mxu0 0.0
    %2035 = vmatpush1.xpose.msra.mxu0 0.0
    %2036 = vmatprep.subr.mxu0 0.0
    %2037 = vmatpush1.xpose.msra.mxu0 0.0
    %2038 = vmatprep.subr.mxu0 0.0
    %2039 = vmatpush1.xpose.msra.mxu0 0.0
    %2040 = vmatprep.subr.mxu0 0.0
    %2041 = vmatpush1.xpose.msra.mxu0 0.0
    %2042 = vmatprep.subr.mxu0 0.0
    %2043 = vmatpush1.xpose.msra.mxu0 0.0
    %2044 = vmatprep.subr.mxu0 0.0
    %2045 = vmatpush1.xpose.msra.mxu0 0.0
    %2046 = vmatprep.subr.mxu0 0.0
    %2047 = vmatpush1.xpose.msra.mxu0 0.0
    %2048 = vmatprep.subr.mxu0 0.0
    %2049 = vmatpush1.xpose.msra.mxu0 0.0
    %2050 = vmatprep.subr.mxu0 0.0
    %2051 = vmatpush1.xpose.msra.mxu0 0.0
    %2052 = vmatprep.mubr.f32.mxu0 0.0
    %2053 = vmatmul.mubr.f32.gmra.mrb[0].mxu0 %v990
    %v2054 = vpop.f32.mrb[0].mxu0
    %v2055 = vadd.f32 %v988, %v2054
    %v2056 = vpop.f32.mrb[0].mxu0
    %2057 = vdwg.mxu0
    %2058 = vst.msk [vmem:[#allocation3 + $0x1] sm:$0x1] %vm1065, %v2055
    %v2059 = vsel %vm1065, %v2055, -inf
    %2060 = vmax.xlane.f32.xlu0 %v2059
    %v2061 = vpop.xlane.xlu0 %2060
    %v2062 = vsub.f32 %v2055, %v2061
    %v2063 = vmul.f32 %v2062, 1.442695
    %v2064 = vpow.pop %v2063
    %v2065 = vsel %vm1065, %v2064, 0.0
    %2066 = vadd.xlane.f32.xlu0 %v2065
    %v2067 = vpop.xlane.xlu0 %2066
    %v2068 = vrcp.pop %v2067
    %v2069 = vmul.f32 %v2064, %v2068
    %2070 = vst.msk [vmem:[#allocation5 + $0x1] sm:$0x1] %vm1065, %v2069
    // Predicated region
    $region30: #{tpu_custom_call.1} parent=1 // pred_check
      _
    $region31: #{tpu_custom_call.1} parent=1 // pred_check_branch
      %2072 = sbr.rel (0) target = $region33
    $region32: #{tpu_custom_call.1} parent=1 // pred_region
      %s2074 = ssub.s32 32, 32
      %2075 = vsyncadd [#allocation4], %s2074
      %s2077 = sshll.u32 [#allocation3], 4
      %s2078 = int_to_ptr.vmem [resolvable:$true] %s2077
      %2080 = dma.vmem_to_hbm [thread:$0]  %s2078, 32, %s7, [#allocation4]
    $region33: #{tpu_custom_call.1} parent=1 // pred_fallthru
      _
    // Predicated region
    $region34: #{tpu_custom_call.1} parent=1 // pred_check
      _
    $region35: #{tpu_custom_call.1} parent=1 // pred_check_branch
      %2082 = sbr.rel (0) target = $region37
    $region36: #{tpu_custom_call.1} parent=1 // pred_region
      %s2084 = ssub.s32 32, 32
      %2085 = vsyncadd [#allocation6], %s2084
      %s2087 = sshll.u32 [#allocation5], 4
      %s2088 = int_to_ptr.vmem [resolvable:$true] %s2087
      %2090 = dma.vmem_to_hbm [thread:$0]  %s2088, 32, %s8, [#allocation6]
    $region37: #{tpu_custom_call.1} parent=1 // pred_fallthru
      _
    // Predicated region
    $region38: #{tpu_custom_call.1} parent=1 // pred_check
      _
    $region39: #{tpu_custom_call.1} parent=1 // pred_check_branch
      %2092 = sbr.rel (0) target = $region41
    $region40: #{tpu_custom_call.1} parent=1 // pred_region
      %2093 = dma.done [#allocation4], 32
    $region41: #{tpu_custom_call.1} parent=1 // pred_fallthru
      _
    // Predicated region
    $region42: #{tpu_custom_call.1} parent=1 // pred_check
      _
    $region43: #{tpu_custom_call.1} parent=1 // pred_check_branch
      %2095 = sbr.rel (0) target = $region45
    $region44: #{tpu_custom_call.1} parent=1 // pred_region
      %2096 = dma.done [#allocation6], 32
    $region45: #{tpu_custom_call.1} parent=1 // pred_fallthru
      _
    %2097 = vsyncpa [#allocation4], 1
    %2098 = vsyncpa [#allocation6], 1

</llo_original>
